<compile_context>
chip_gen: v5e
topology: v5e:2x2
jax: 0.10.0
libtpu: 0.0.40
codegen_flags: <defaults>
</compile_context>

<pallas_src>
import functools

import jax
import jax.numpy as jnp
from jax.experimental import pallas as pl
from jax.experimental.pallas import tpu as pltpu

EPS = 1e-5  # nn.BatchNorm2d default eps


def _round_up(a, b):
    return (a + b - 1) // b * b


# ---------------------------------------------------------------------------
# Pass 1: per-channel batch statistics, written as per-tile partial rows.
# ---------------------------------------------------------------------------
def _stats_kernel(cols_ref, w_ref, s_ref, ss_ref):
    # cols_ref: (4, tm, K) bf16, w_ref: (K, Cpad) bf16
    # s_ref / ss_ref: (1, 1, Cpad) f32 per-tile partial sums.
    w = w_ref[...]
    s = jnp.zeros((1, s_ref.shape[-1]), jnp.float32)
    ss = jnp.zeros((1, ss_ref.shape[-1]), jnp.float32)
    for o in range(4):  # unrolled: 4 pool offsets
        y = jnp.dot(cols_ref[o], w, preferred_element_type=jnp.float32)
        s = s + jnp.sum(y, axis=0, keepdims=True)
        ss = ss + jnp.sum(y * y, axis=0, keepdims=True)
    s_ref[0] = s
    ss_ref[0] = ss


def _stats_y_kernel(cols_ref, w_ref, s_ref, ss_ref, y_ref):
    # Same as above, but also spills y (bf16) so pass 2 skips the matmul.
    w = w_ref[...]
    s = jnp.zeros((1, s_ref.shape[-1]), jnp.float32)
    ss = jnp.zeros((1, ss_ref.shape[-1]), jnp.float32)
    for o in range(4):
        y = jnp.dot(cols_ref[o], w, preferred_element_type=jnp.float32)
        s = s + jnp.sum(y, axis=0, keepdims=True)
        ss = ss + jnp.sum(y * y, axis=0, keepdims=True)
        y_ref[o] = y.astype(y_ref.dtype)
    s_ref[0] = s
    ss_ref[0] = ss


# ---------------------------------------------------------------------------
# Pass 2: BN affine + ReLU + 2x2 max-pool (max over the 4 offset planes).
# ---------------------------------------------------------------------------
def _pool_recompute_kernel(cols_ref, w_ref, scale_ref, shift_ref, o_ref):
    w = w_ref[...]
    scale = scale_ref[...]
    shift = shift_ref[...]

    def bn_relu(o):
        y = jnp.dot(cols_ref[o], w, preferred_element_type=jnp.float32)
        return jnp.maximum(y * scale + shift, 0.0)

    o_ref[...] = jnp.maximum(jnp.maximum(bn_relu(0), bn_relu(1)),
                             jnp.maximum(bn_relu(2), bn_relu(3)))


def _pool_from_y_kernel(y_ref, scale_ref, shift_ref, o_ref):
    scale = scale_ref[...]
    shift = shift_ref[...]

    def bn_relu(o):
        return jnp.maximum(y_ref[o].astype(jnp.float32) * scale + shift, 0.0)

    o_ref[...] = jnp.maximum(jnp.maximum(bn_relu(0), bn_relu(1)),
                             jnp.maximum(bn_relu(2), bn_relu(3)))


def relation_conv_block(x, weight, bias, gamma, beta, padding=0, tile_m=None):
    """x: (N, Cin, H, W) NCHW; weight: (Cout, Cin, 3, 3); bias/gamma/beta: (Cout,)."""
    del bias  # exact no-op: batch-statistics BatchNorm subtracts it out with the mean
    # TODO(synk): if the block is ever run with running stats (eval mode), the bias
    # must be re-added before normalization.
    x = x.astype(jnp.float32)  # matches x.float() in the PyTorch forward
    N, Cin, H, W = x.shape
    Cout = weight.shape[0]
    if padding:
        x = jnp.pad(x, ((0, 0), (0, 0), (padding, padding), (padding, padding)))
    Hp, Wp = H + 2 * padding, W + 2 * padding
    OH, OW = Hp - 2, Wp - 2
    # TODO(synk): odd OH/OW (maxpool drops the last row/col but BN stats still
    # include it) is not handled.
    assert OH % 2 == 0 and OW % 2 == 0, "even conv output required"
    PH, PW = OH // 2, OW // 2
    M = N * PH * PW                                   # pooled output pixels
    K = Cin * 9
    Cpad = _round_up(Cout, 128)                       # lane-dense channel axis

    # ---- im2col (host-side glue), in bf16 so all glue moves half the bytes ----
    # TODO(synk): for large activations, move the 3x3 gather into the kernel
    # (9 shifted (tile,Cin)@(Cin,Cpad) matmuls on an NHWC tile) to avoid the ~9x
    # im2col materialization and the K<128 lane waste when Cin is small.
    xb = x.astype(jnp.bfloat16)
    patches = [xb[:, :, kh:kh + OH, kw:kw + OW] for kh in range(3) for kw in range(3)]
    p = jnp.stack(patches, axis=0)                    # (9, N, Cin, OH, OW)
    p = jnp.transpose(p, (1, 3, 4, 2, 0))             # (N, OH, OW, Cin, 9)
    colsfull = p.reshape(N, OH, OW, K)
    cols4 = jnp.stack(
        [colsfull[:, dh::2, dw::2, :].reshape(M, K)
         for (dh, dw) in ((0, 0), (0, 1), (1, 0), (1, 1))], axis=0)   # (4, M, K) bf16

    # ---- tile sizing from a VMEM budget ----
    reuse_y = K > 2 * Cpad        # spill y from pass 1 iff cheaper than re-reading cols
    budget = 24 * 1024 * 1024     # double-buffered working-set target (safe on v7x too)
    per_row = 2 * (4 * K * 2) + 2 * (Cpad * 4)        # cols in (bf16) + f32 out, x2 bufs
    if reuse_y:
        per_row += 2 * 2 * (4 * Cpad * 2)             # bf16 y written (p1) + read (p2)
    const = 2 * (K * Cpad * 2) + 8 * Cpad * 4
    tm = max(8, (budget - const) // per_row)
    if tile_m is not None:
        tm = tile_m
    tm = min(tm, 1024)                                # diminishing returns past ~1k rows
    tm = min(tm, _round_up((M + 1) // 2, 8))          # keep nt >= 2 (v7x megacore)
    tm = max(8, _round_up(tm, 8))
    M_pad = _round_up(M, tm)
    nt = M_pad // tm

    # Zero pad rows contribute nothing to the BN sums; they are sliced off below.
    cols4 = jnp.pad(cols4, ((0, 0), (0, M_pad - M), (0, 0)))

    w_mat = weight.reshape(Cout, K).T.astype(jnp.float32)            # (K, Cout)
    w_bf = jnp.pad(w_mat, ((0, 0), (0, Cpad - Cout))).astype(jnp.bfloat16)
    g_row = jnp.pad(gamma.astype(jnp.float32), (0, Cpad - Cout)).reshape(1, Cpad)
    be_row = jnp.pad(beta.astype(jnp.float32), (0, Cpad - Cout)).reshape(1, Cpad)

    cparams = pltpu.CompilerParams(
        dimension_semantics=("parallel",),            # per-tile outputs -> megacore OK
        vmem_limit_bytes=40 * 1024 * 1024)

    cols_spec = pl.BlockSpec((4, tm, K), lambda i: (0, i, 0))
    w_spec = pl.BlockSpec((K, Cpad), lambda i: (0, 0))
    part_spec = pl.BlockSpec((1, 1, Cpad), lambda i: (i, 0, 0))
    row_spec = pl.BlockSpec((1, Cpad), lambda i: (0, 0))
    y_spec = pl.BlockSpec((4, tm, Cpad), lambda i: (0, i, 0))

    # ---- pass 1: per-channel batch statistics (per-tile partials) ----
    if reuse_y:
        s_p, ss_p, y_bf = pl.pallas_call(
            _stats_y_kernel,
            out_shape=(jax.ShapeDtypeStruct((nt, 1, Cpad), jnp.float32),
                       jax.ShapeDtypeStruct((nt, 1, Cpad), jnp.float32),
                       jax.ShapeDtypeStruct((4, M_pad, Cpad), jnp.bfloat16)),
            grid=(nt,),
            in_specs=[cols_spec, w_spec],
            out_specs=(part_spec, part_spec, y_spec),
            compiler_params=cparams,
        )(cols4, w_bf)
    else:
        s_p, ss_p = pl.pallas_call(
            _stats_kernel,
            out_shape=(jax.ShapeDtypeStruct((nt, 1, Cpad), jnp.float32),
                       jax.ShapeDtypeStruct((nt, 1, Cpad), jnp.float32)),
            grid=(nt,),
            in_specs=[cols_spec, w_spec],
            out_specs=(part_spec, part_spec),
            compiler_params=cparams,
        )(cols4, w_bf)
        y_bf = None

    # BatchNorm2d(track_running_stats=False): batch statistics over (N, OH, OW),
    # biased variance.
    # TODO(synk): E[y^2]-mean^2 can lose precision when |mean| >> std; switch to a
    # centered second pass if that regime ever matters.
    count = jnp.float32(4 * M)                        # == N * OH * OW
    s = jnp.sum(s_p, axis=(0, 1)).reshape(1, Cpad)
    ss = jnp.sum(ss_p, axis=(0, 1)).reshape(1, Cpad)
    mean = s / count
    var = jnp.maximum(ss / count - mean * mean, 0.0)
    inv = jax.lax.rsqrt(var + EPS)
    scale = g_row * inv
    shift = be_row - mean * scale

    # ---- pass 2: BN affine + ReLU + 2x2 max-pool ----
    out_spec = pl.BlockSpec((tm, Cpad), lambda i: (i, 0))
    if reuse_y:
        out_flat = pl.pallas_call(
            _pool_from_y_kernel,
            out_shape=jax.ShapeDtypeStruct((M_pad, Cpad), jnp.float32),
            grid=(nt,),
            in_specs=[y_spec, row_spec, row_spec],
            out_specs=out_spec,
            compiler_params=cparams,
        )(y_bf, scale, shift)
    else:
        out_flat = pl.pallas_call(
            _pool_recompute_kernel,
            out_shape=jax.ShapeDtypeStruct((M_pad, Cpad), jnp.float32),
            grid=(nt,),
            in_specs=[cols_spec, w_spec, row_spec, row_spec],
            out_specs=out_spec,
            compiler_params=cparams,
        )(cols4, w_bf, scale, shift)

    # TODO(synk): if the consumer accepts NHWC / bf16 output, skip this transpose
    # and store bf16 from the kernel to halve the output-path HBM traffic.
    out = out_flat[:M, :Cout].reshape(N, PH, PW, Cout)
    return jnp.transpose(out, (0, 3, 1, 2))            # back to NCHW


def _reference(x, weight, bias, gamma, beta, padding=0):
    # Pure-JAX reference (XLA conv) for a silent correctness check.
    x = x.astype(jnp.float32)
    y = jax.lax.conv_general_dilated(
        x, weight.astype(jnp.float32), (1, 1), [(padding, padding)] * 2,
        dimension_numbers=("NCHW", "OIHW", "NCHW"))
    y = y + bias.reshape(1, -1, 1, 1)
    mean = jnp.mean(y, axis=(0, 2, 3), keepdims=True)
    var = jnp.mean((y - mean) ** 2, axis=(0, 2, 3), keepdims=True)
    y = (y - mean) / jnp.sqrt(var + EPS) * gamma.reshape(1, -1, 1, 1) + beta.reshape(1, -1, 1, 1)
    y = jnp.maximum(y, 0.0)
    N, C, Hc, Wc = y.shape
    y = y[:, :, : Hc // 2 * 2, : Wc // 2 * 2].reshape(N, C, Hc // 2, 2, Wc // 2, 2)
    return jnp.max(y, axis=(3, 5))


if __name__ == "__main__":
    key = jax.random.PRNGKey(0)
    kx, kw, kb, kg, kbeta = jax.random.split(key, 5)

    N, indim, outdim, H, W, padding = 2, 4, 8, 16, 16, 0

    x = jax.random.normal(kx, (N, indim, H, W), jnp.float32)
    # Deterministic synthetic parameters (Conv2d weight/bias, BN affine gamma/beta).
    weight = jax.random.normal(kw, (outdim, indim, 3, 3), jnp.float32) * 0.1
    bias = jax.random.normal(kb, (outdim,), jnp.float32) * 0.05
    gamma = 1.0 + 0.1 * jax.random.normal(kg, (outdim,), jnp.float32)
    beta = 0.05 * jax.random.normal(kbeta, (outdim,), jnp.float32)

    # Round matmul operands to bf16 so the (bf16-MXU, f32-accumulate) kernel and
    # the f32 XLA reference see identical inputs.
    xq = x.astype(jnp.bfloat16).astype(jnp.float32)
    wq = weight.astype(jnp.bfloat16).astype(jnp.float32)

    fwd = jax.jit(functools.partial(relation_conv_block, padding=padding))
    out = jax.block_until_ready(fwd(xq, wq, bias, gamma, beta))

    ref = jax.block_until_ready(_reference(xq, wq, bias, gamma, beta, padding=padding))
    assert out.shape == ref.shape == (N, outdim, (H - 2) // 2, (W - 2) // 2)
    assert jnp.allclose(out, ref, rtol=2e-3, atol=2e-3)

    print("KERNEL_OK")
</pallas_src>

<mosaic_0001>
module attributes {stable_mosaic.version = 11 : i64} {
  func.func @_stats_kernel(%arg0: i32, %arg1: memref<4x56x36xbf16, #tpu.memory_space<vmem>>, %arg2: memref<36x128xbf16, #tpu.memory_space<vmem>>, %arg3: memref<1x1x128xf32, #tpu.memory_space<vmem>>, %arg4: memref<1x1x128xf32, #tpu.memory_space<vmem>>) attributes {dimension_semantics = [#tpu.dimension_semantics<parallel>], iteration_bounds = array<i64: 2>, scalar_prefetch = 0 : i64, scratch_operands = 0 : i64, tpu.core_type = #tpu.core_type<tc>, window_params = [{transform_indices = @transform_0, window_bounds = array<i64: 4, 56, 36>}, {pipeline_mode = #tpu.pipeline_mode<synchronous>, transform_indices = @transform_1, window_bounds = array<i64: 36, 128>}, {transform_indices = @transform_2, window_bounds = array<i64: 1, 1, 128>}, {transform_indices = @transform_3, window_bounds = array<i64: 1, 1, 128>}]} {
    %c0 = arith.constant 0 : index
    %c0_0 = arith.constant 0 : index
    %0 = vector.load %arg2[%c0, %c0_0] : memref<36x128xbf16, #tpu.memory_space<vmem>>, vector<36x128xbf16>
    %cst = arith.constant 0.000000e+00 : f32
    %1 = vector.broadcast %cst : f32 to vector<1x128xf32>
    %cst_1 = arith.constant 0.000000e+00 : f32
    %2 = vector.broadcast %cst_1 : f32 to vector<1x128xf32>
    %c0_2 = arith.constant 0 : index
    %c0_3 = arith.constant 0 : index
    %c0_4 = arith.constant 0 : index
    %3 = vector.load %arg1[%c0_2, %c0_3, %c0_4] : memref<4x56x36xbf16, #tpu.memory_space<vmem>>, vector<1x56x36xbf16>
    %4 = vector.shape_cast %3 : vector<1x56x36xbf16> to vector<56x36xbf16>
    %cst_5 = arith.constant dense<0.000000e+00> : vector<56x128xf32>
    %5 = tpu.matmul %4, %0, %cst_5 {dimension_numbers = #tpu.dot_dimension_numbers<[1], [0], [0], [1], [0, 0, 1, 1], [], []>} : vector<56x36xbf16>, vector<36x128xbf16>, vector<56x128xf32> -> vector<56x128xf32>
    %cst_6 = arith.constant dense<0.000000e+00> : vector<128xf32>
    %6 = vector.multi_reduction <add>, %5, %cst_6 [0] : vector<56x128xf32> to vector<128xf32>
    %7 = vector.shape_cast %6 : vector<128xf32> to vector<1x128xf32>
    %8 = arith.addf %1, %7 : vector<1x128xf32>
    %9 = arith.mulf %5, %5 : vector<56x128xf32>
    %cst_7 = arith.constant dense<0.000000e+00> : vector<128xf32>
    %10 = vector.multi_reduction <add>, %9, %cst_7 [0] : vector<56x128xf32> to vector<128xf32>
    %11 = vector.shape_cast %10 : vector<128xf32> to vector<1x128xf32>
    %12 = arith.addf %2, %11 : vector<1x128xf32>
    %c1 = arith.constant 1 : index
    %c0_8 = arith.constant 0 : index
    %c0_9 = arith.constant 0 : index
    %13 = vector.load %arg1[%c1, %c0_8, %c0_9] : memref<4x56x36xbf16, #tpu.memory_space<vmem>>, vector<1x56x36xbf16>
    %14 = vector.shape_cast %13 : vector<1x56x36xbf16> to vector<56x36xbf16>
    %cst_10 = arith.constant dense<0.000000e+00> : vector<56x128xf32>
    %15 = tpu.matmul %14, %0, %cst_10 {dimension_numbers = #tpu.dot_dimension_numbers<[1], [0], [0], [1], [0, 0, 1, 1], [], []>} : vector<56x36xbf16>, vector<36x128xbf16>, vector<56x128xf32> -> vector<56x128xf32>
    %cst_11 = arith.constant dense<0.000000e+00> : vector<128xf32>
    %16 = vector.multi_reduction <add>, %15, %cst_11 [0] : vector<56x128xf32> to vector<128xf32>
    %17 = vector.shape_cast %16 : vector<128xf32> to vector<1x128xf32>
    %18 = arith.addf %8, %17 : vector<1x128xf32>
    %19 = arith.mulf %15, %15 : vector<56x128xf32>
    %cst_12 = arith.constant dense<0.000000e+00> : vector<128xf32>
    %20 = vector.multi_reduction <add>, %19, %cst_12 [0] : vector<56x128xf32> to vector<128xf32>
    %21 = vector.shape_cast %20 : vector<128xf32> to vector<1x128xf32>
    %22 = arith.addf %12, %21 : vector<1x128xf32>
    %c2 = arith.constant 2 : index
    %c0_13 = arith.constant 0 : index
    %c0_14 = arith.constant 0 : index
    %23 = vector.load %arg1[%c2, %c0_13, %c0_14] : memref<4x56x36xbf16, #tpu.memory_space<vmem>>, vector<1x56x36xbf16>
    %24 = vector.shape_cast %23 : vector<1x56x36xbf16> to vector<56x36xbf16>
    %cst_15 = arith.constant dense<0.000000e+00> : vector<56x128xf32>
    %25 = tpu.matmul %24, %0, %cst_15 {dimension_numbers = #tpu.dot_dimension_numbers<[1], [0], [0], [1], [0, 0, 1, 1], [], []>} : vector<56x36xbf16>, vector<36x128xbf16>, vector<56x128xf32> -> vector<56x128xf32>
    %cst_16 = arith.constant dense<0.000000e+00> : vector<128xf32>
    %26 = vector.multi_reduction <add>, %25, %cst_16 [0] : vector<56x128xf32> to vector<128xf32>
    %27 = vector.shape_cast %26 : vector<128xf32> to vector<1x128xf32>
    %28 = arith.addf %18, %27 : vector<1x128xf32>
    %29 = arith.mulf %25, %25 : vector<56x128xf32>
    %cst_17 = arith.constant dense<0.000000e+00> : vector<128xf32>
    %30 = vector.multi_reduction <add>, %29, %cst_17 [0] : vector<56x128xf32> to vector<128xf32>
    %31 = vector.shape_cast %30 : vector<128xf32> to vector<1x128xf32>
    %32 = arith.addf %22, %31 : vector<1x128xf32>
    %c3 = arith.constant 3 : index
    %c0_18 = arith.constant 0 : index
    %c0_19 = arith.constant 0 : index
    %33 = vector.load %arg1[%c3, %c0_18, %c0_19] : memref<4x56x36xbf16, #tpu.memory_space<vmem>>, vector<1x56x36xbf16>
    %34 = vector.shape_cast %33 : vector<1x56x36xbf16> to vector<56x36xbf16>
    %cst_20 = arith.constant dense<0.000000e+00> : vector<56x128xf32>
    %35 = tpu.matmul %34, %0, %cst_20 {dimension_numbers = #tpu.dot_dimension_numbers<[1], [0], [0], [1], [0, 0, 1, 1], [], []>} : vector<56x36xbf16>, vector<36x128xbf16>, vector<56x128xf32> -> vector<56x128xf32>
    %cst_21 = arith.constant dense<0.000000e+00> : vector<128xf32>
    %36 = vector.multi_reduction <add>, %35, %cst_21 [0] : vector<56x128xf32> to vector<128xf32>
    %37 = vector.shape_cast %36 : vector<128xf32> to vector<1x128xf32>
    %38 = arith.addf %28, %37 : vector<1x128xf32>
    %39 = arith.mulf %35, %35 : vector<56x128xf32>
    %cst_22 = arith.constant dense<0.000000e+00> : vector<128xf32>
    %40 = vector.multi_reduction <add>, %39, %cst_22 [0] : vector<56x128xf32> to vector<128xf32>
    %41 = vector.shape_cast %40 : vector<128xf32> to vector<1x128xf32>
    %42 = arith.addf %32, %41 : vector<1x128xf32>
    %c0_23 = arith.constant 0 : index
    %c0_24 = arith.constant 0 : index
    %c0_25 = arith.constant 0 : index
    %43 = vector.load %arg3[%c0_23, %c0_24, %c0_25] : memref<1x1x128xf32, #tpu.memory_space<vmem>>, vector<1x1x128xf32>
    %44 = vector.shape_cast %43 : vector<1x1x128xf32> to vector<1x128xf32>
    %45 = vector.shape_cast %38 : vector<1x128xf32> to vector<1x1x128xf32>
    tpu.vector_store %arg3[%c0_23, %c0_24, %c0_25], %45 {strides = array<i32>} : memref<1x1x128xf32, #tpu.memory_space<vmem>>, vector<1x1x128xf32>,
    %c0_26 = arith.constant 0 : index
    %c0_27 = arith.constant 0 : index
    %c0_28 = arith.constant 0 : index
    %46 = vector.load %arg4[%c0_26, %c0_27, %c0_28] : memref<1x1x128xf32, #tpu.memory_space<vmem>>, vector<1x1x128xf32>
    %47 = vector.shape_cast %46 : vector<1x1x128xf32> to vector<1x128xf32>
    %48 = vector.shape_cast %42 : vector<1x128xf32> to vector<1x1x128xf32>
    tpu.vector_store %arg4[%c0_26, %c0_27, %c0_28], %48 {strides = array<i32>} : memref<1x1x128xf32, #tpu.memory_space<vmem>>, vector<1x1x128xf32>,
    return
  }
  func.func @transform_0(%arg0: i32) -> (i32, i32, i32) {
    %c0_i32 = arith.constant 0 : i32
    %c0_i32_0 = arith.constant 0 : i32
    %c0_i32_1 = arith.constant 0 : i32
    return %c0_i32, %arg0, %c0_i32_0 : i32, i32, i32
  }
  func.func @transform_1(%arg0: i32) -> (i32, i32) {
    %c0_i32 = arith.constant 0 : i32
    %c0_i32_0 = arith.constant 0 : i32
    %c0_i32_1 = arith.constant 0 : i32
    return %c0_i32, %c0_i32_0 : i32, i32
  }
  func.func @transform_2(%arg0: i32) -> (i32, i32, i32) {
    %c0_i32 = arith.constant 0 : i32
    %c0_i32_0 = arith.constant 0 : i32
    %c0_i32_1 = arith.constant 0 : i32
    return %arg0, %c0_i32, %c0_i32_0 : i32, i32, i32
  }
  func.func @transform_3(%arg0: i32) -> (i32, i32, i32) {
    %c0_i32 = arith.constant 0 : i32
    %c0_i32_0 = arith.constant 0 : i32
    %c0_i32_1 = arith.constant 0 : i32
    return %arg0, %c0_i32, %c0_i32_0 : i32, i32, i32
  }
}

module attributes {stable_mosaic.version = 11 : i64} {
  func.func @_pool_recompute_kernel(%arg0: i32, %arg1: memref<4x56x36xbf16, #tpu.memory_space<vmem>>, %arg2: memref<36x128xbf16, #tpu.memory_space<vmem>>, %arg3: memref<1x128xf32, #tpu.memory_space<vmem>>, %arg4: memref<1x128xf32, #tpu.memory_space<vmem>>, %arg5: memref<56x128xf32, #tpu.memory_space<vmem>>) attributes {dimension_semantics = [#tpu.dimension_semantics<parallel>], iteration_bounds = array<i64: 2>, scalar_prefetch = 0 : i64, scratch_operands = 0 : i64, tpu.core_type = #tpu.core_type<tc>, window_params = [{transform_indices = @transform_0, window_bounds = array<i64: 4, 56, 36>}, {pipeline_mode = #tpu.pipeline_mode<synchronous>, transform_indices = @transform_1, window_bounds = array<i64: 36, 128>}, {pipeline_mode = #tpu.pipeline_mode<synchronous>, transform_indices = @transform_2, window_bounds = array<i64: 1, 128>}, {pipeline_mode = #tpu.pipeline_mode<synchronous>, transform_indices = @transform_3, window_bounds = array<i64: 1, 128>}, {transform_indices = @transform_4, window_bounds = array<i64: 56, 128>}]} {
    %c0 = arith.constant 0 : index
    %c0_0 = arith.constant 0 : index
    %0 = vector.load %arg2[%c0, %c0_0] : memref<36x128xbf16, #tpu.memory_space<vmem>>, vector<36x128xbf16>
    %c0_1 = arith.constant 0 : index
    %c0_2 = arith.constant 0 : index
    %1 = vector.load %arg3[%c0_1, %c0_2] : memref<1x128xf32, #tpu.memory_space<vmem>>, vector<1x128xf32>
    %c0_3 = arith.constant 0 : index
    %c0_4 = arith.constant 0 : index
    %2 = vector.load %arg4[%c0_3, %c0_4] : memref<1x128xf32, #tpu.memory_space<vmem>>, vector<1x128xf32>
    %c0_5 = arith.constant 0 : index
    %c0_6 = arith.constant 0 : index
    %c0_7 = arith.constant 0 : index
    %3 = vector.load %arg1[%c0_5, %c0_6, %c0_7] : memref<4x56x36xbf16, #tpu.memory_space<vmem>>, vector<1x56x36xbf16>
    %4 = vector.shape_cast %3 : vector<1x56x36xbf16> to vector<56x36xbf16>
    %cst = arith.constant dense<0.000000e+00> : vector<56x128xf32>
    %5 = tpu.matmul %4, %0, %cst {dimension_numbers = #tpu.dot_dimension_numbers<[1], [0], [0], [1], [0, 0, 1, 1], [], []>} : vector<56x36xbf16>, vector<36x128xbf16>, vector<56x128xf32> -> vector<56x128xf32>
    %6 = vector.broadcast %1 : vector<1x128xf32> to vector<56x128xf32>
    %7 = arith.mulf %5, %6 : vector<56x128xf32>
    %8 = vector.broadcast %2 : vector<1x128xf32> to vector<56x128xf32>
    %9 = arith.addf %7, %8 : vector<56x128xf32>
    %cst_8 = arith.constant 0.000000e+00 : f32
    %10 = vector.broadcast %cst_8 : f32 to vector<56x128xf32>
    %11 = arith.maximumf %9, %10 : vector<56x128xf32>
    %c1 = arith.constant 1 : index
    %c0_9 = arith.constant 0 : index
    %c0_10 = arith.constant 0 : index
    %12 = vector.load %arg1[%c1, %c0_9, %c0_10] : memref<4x56x36xbf16, #tpu.memory_space<vmem>>, vector<1x56x36xbf16>
    %13 = vector.shape_cast %12 : vector<1x56x36xbf16> to vector<56x36xbf16>
    %cst_11 = arith.constant dense<0.000000e+00> : vector<56x128xf32>
    %14 = tpu.matmul %13, %0, %cst_11 {dimension_numbers = #tpu.dot_dimension_numbers<[1], [0], [0], [1], [0, 0, 1, 1], [], []>} : vector<56x36xbf16>, vector<36x128xbf16>, vector<56x128xf32> -> vector<56x128xf32>
    %15 = vector.broadcast %1 : vector<1x128xf32> to vector<56x128xf32>
    %16 = arith.mulf %14, %15 : vector<56x128xf32>
    %17 = vector.broadcast %2 : vector<1x128xf32> to vector<56x128xf32>
    %18 = arith.addf %16, %17 : vector<56x128xf32>
    %cst_12 = arith.constant 0.000000e+00 : f32
    %19 = vector.broadcast %cst_12 : f32 to vector<56x128xf32>
    %20 = arith.maximumf %18, %19 : vector<56x128xf32>
    %21 = arith.maximumf %11, %20 : vector<56x128xf32>
    %c2 = arith.constant 2 : index
    %c0_13 = arith.constant 0 : index
    %c0_14 = arith.constant 0 : index
    %22 = vector.load %arg1[%c2, %c0_13, %c0_14] : memref<4x56x36xbf16, #tpu.memory_space<vmem>>, vector<1x56x36xbf16>
    %23 = vector.shape_cast %22 : vector<1x56x36xbf16> to vector<56x36xbf16>
    %cst_15 = arith.constant dense<0.000000e+00> : vector<56x128xf32>
    %24 = tpu.matmul %23, %0, %cst_15 {dimension_numbers = #tpu.dot_dimension_numbers<[1], [0], [0], [1], [0, 0, 1, 1], [], []>} : vector<56x36xbf16>, vector<36x128xbf16>, vector<56x128xf32> -> vector<56x128xf32>
    %25 = vector.broadcast %1 : vector<1x128xf32> to vector<56x128xf32>
    %26 = arith.mulf %24, %25 : vector<56x128xf32>
    %27 = vector.broadcast %2 : vector<1x128xf32> to vector<56x128xf32>
    %28 = arith.addf %26, %27 : vector<56x128xf32>
    %cst_16 = arith.constant 0.000000e+00 : f32
    %29 = vector.broadcast %cst_16 : f32 to vector<56x128xf32>
    %30 = arith.maximumf %28, %29 : vector<56x128xf32>
    %c3 = arith.constant 3 : index
    %c0_17 = arith.constant 0 : index
    %c0_18 = arith.constant 0 : index
    %31 = vector.load %arg1[%c3, %c0_17, %c0_18] : memref<4x56x36xbf16, #tpu.memory_space<vmem>>, vector<1x56x36xbf16>
    %32 = vector.shape_cast %31 : vector<1x56x36xbf16> to vector<56x36xbf16>
    %cst_19 = arith.constant dense<0.000000e+00> : vector<56x128xf32>
    %33 = tpu.matmul %32, %0, %cst_19 {dimension_numbers = #tpu.dot_dimension_numbers<[1], [0], [0], [1], [0, 0, 1, 1], [], []>} : vector<56x36xbf16>, vector<36x128xbf16>, vector<56x128xf32> -> vector<56x128xf32>
    %34 = vector.broadcast %1 : vector<1x128xf32> to vector<56x128xf32>
    %35 = arith.mulf %33, %34 : vector<56x128xf32>
    %36 = vector.broadcast %2 : vector<1x128xf32> to vector<56x128xf32>
    %37 = arith.addf %35, %36 : vector<56x128xf32>
    %cst_20 = arith.constant 0.000000e+00 : f32
    %38 = vector.broadcast %cst_20 : f32 to vector<56x128xf32>
    %39 = arith.maximumf %37, %38 : vector<56x128xf32>
    %40 = arith.maximumf %30, %39 : vector<56x128xf32>
    %41 = arith.maximumf %21, %40 : vector<56x128xf32>
    %c0_21 = arith.constant 0 : index
    %c0_22 = arith.constant 0 : index
    %42 = vector.load %arg5[%c0_21, %c0_22] : memref<56x128xf32, #tpu.memory_space<vmem>>, vector<56x128xf32>
    tpu.vector_store %arg5[%c0_21, %c0_22], %41 {strides = array<i32>} : memref<56x128xf32, #tpu.memory_space<vmem>>, vector<56x128xf32>,
    return
  }
  func.func @transform_0(%arg0: i32) -> (i32, i32, i32) {
    %c0_i32 = arith.constant 0 : i32
    %c0_i32_0 = arith.constant 0 : i32
    %c0_i32_1 = arith.constant 0 : i32
    return %c0_i32, %arg0, %c0_i32_0 : i32, i32, i32
  }
  func.func @transform_1(%arg0: i32) -> (i32, i32) {
    %c0_i32 = arith.constant 0 : i32
    %c0_i32_0 = arith.constant 0 : i32
    %c0_i32_1 = arith.constant 0 : i32
    return %c0_i32, %c0_i32_0 : i32, i32
  }
  func.func @transform_2(%arg0: i32) -> (i32, i32) {
    %c0_i32 = arith.constant 0 : i32
    %c0_i32_0 = arith.constant 0 : i32
    %c0_i32_1 = arith.constant 0 : i32
    return %c0_i32, %c0_i32_0 : i32, i32
  }
  func.func @transform_3(%arg0: i32) -> (i32, i32) {
    %c0_i32 = arith.constant 0 : i32
    %c0_i32_0 = arith.constant 0 : i32
    %c0_i32_1 = arith.constant 0 : i32
    return %c0_i32, %c0_i32_0 : i32, i32
  }
  func.func @transform_4(%arg0: i32) -> (i32, i32) {
    %c0_i32 = arith.constant 0 : i32
    %c0_i32_0 = arith.constant 0 : i32
    return %arg0, %c0_i32 : i32, i32
  }
}

</mosaic_0001>

<llo_original>
// kernel: relation_conv_block.2
$region0: #{relation_conv_block.2}
  #allocation0 [shape = 'u32[]', space=smem, size = 0x4, offset = 0x4, fixed_abs, tag = 'smem constant byte address 0x4 - core index']
  #allocation1 [shape = 'u32[72,128]{1,0:T(1,128)}', space=vmem, size = 0x9000, scoped, tag = 'internal scratch']
  %s0 = inlined_call_operand.vmem [shape: bf16[4,112,36], index: 0, kind: input, shape index: {}]
  %s1 = inlined_call_operand.vmem [shape: bf16[36,128], index: 1, kind: input, shape index: {}]
  %s2 = inlined_call_operand.vmem [shape: f32[2,1,128], index: 2, kind: output, shape index: {0}]
  %s3 = inlined_call_operand.vmem [shape: f32[2,1,128], index: 3, kind: output, shape index: {1}]
  %4 = xla_tuple %s2, %s3
  %s5 = sld [smem:[#allocation0]]
  $region90: #{relation_conv_block.2} parent=0
    _
  %s7 = ssub.s32 1, %s5
  %s8 = scalar_select 0, %s7, %s5
  $region1: #{relation_conv_block.2} parent=0
    #allocation2 [shape = 'u8[114688]{0}', space=vmem, size = 0x1c000, scoped, tag = 'input window, operand 0']
    loop: start=0, step=1, limit=4
    $region2: #{relation_conv_block.2} parent=1 // loop_pre_header
      _
    $region3: #{relation_conv_block.2} parent=1 // loop_header
      %s10 = sphi 0, %s14
      %p11 = scmp.ge.s32.totalorder %s10, 4
      %s20 = sphi 0, %s22
      %s23 = sphi 0, %s20
      %s24 = sphi 0, %s23
      %s40 = sphi 0, %s24
      %s44 = sphi 0, %s44
      %s46 = sphi 0, %s44
      %s47 = sphi 0, %s46
      %s61 = sphi 0, %s47
      %s67 = sphi 0, %s69
      %s70 = sphi 0, %s67
      %s71 = sphi 0, %s70
      %s87 = sphi 0, %s71
      %s93 = sphi 0, %s95
      %s96 = sphi 0, %s93
      %s97 = sphi 0, %s96
      %s113 = sphi 0, %s97
    $region4: #{relation_conv_block.2} parent=1 // loop_header_branch
      %13 = sbr.rel (%p11) target = $region8
    $region5: #{relation_conv_block.2} parent=1 // loop_body
      %s15 = ssub.s32 %s10, 1
      %s16 = ssub.s32 %s10, 2
      %s17 = sadd.s32 %s10, 1
      %s18 = ssub.s32 %s10, %s17
      %p19 = scmp.eq.s32.totalorder %s18, 0
      %s21 = sadd.s32 %s20, 1
      %s22 = scalar_select %p19, %s20, %s21
      %p25 = pneg %p19
      %p26 = scmp.eq.s32.totalorder %s10, 1
      %p27 = por %p25, %p26
      %p28 = scmp.ne.s32.totalorder %s20, %s23
      %p29 = scmp.eq.s32.totalorder %s10, 0
      %p30 = por %p28, %p29
      %p31 = scmp.ne.s32.totalorder %s20, %s23
      %p32 = scmp.eq.s32.totalorder %s15, 1
      %p33 = por %p31, %p32
      %p34 = scmp.ne.s32.totalorder %s23, %s24
      %p35 = scmp.eq.s32.totalorder %s15, 0
      %p36 = por %p34, %p35
      %p37 = scmp.ne.s32.totalorder %s23, %s24
      %p38 = scmp.eq.s32.totalorder %s16, 1
      %p39 = por %p37, %p38
      %p41 = scmp.ne.s32.totalorder %s24, %s40
      %p42 = scmp.eq.s32.totalorder %s16, 0
      %p43 = por %p41, %p42
      %s45 = sadd.s32 %s44, 1
      %p48 = scmp.eq.s32.totalorder %s10, 1
      %p49 = scmp.ne.s32.totalorder %s44, %s46
      %p50 = scmp.eq.s32.totalorder %s10, 0
      %p51 = por %p49, %p50
      %p52 = scmp.ne.s32.totalorder %s44, %s46
      %p53 = scmp.eq.s32.totalorder %s15, 1
      %p54 = por %p52, %p53
      %p55 = scmp.ne.s32.totalorder %s46, %s47
      %p56 = scmp.eq.s32.totalorder %s15, 0
      %p57 = por %p55, %p56
      %p58 = scmp.ne.s32.totalorder %s46, %s47
      %p59 = scmp.eq.s32.totalorder %s16, 1
      %p60 = por %p58, %p59
      %p62 = scmp.ne.s32.totalorder %s47, %s61
      %p63 = scmp.eq.s32.totalorder %s16, 0
      %p64 = por %p62, %p63
      %s65 = ssub.s32 %s10, %s17
      %p66 = scmp.eq.s32.totalorder %s65, 0
      %s68 = sadd.s32 %s67, 1
      %s69 = scalar_select %p66, %s67, %s68
      %p72 = pneg %p66
      %p73 = scmp.eq.s32.totalorder %s10, 1
      %p74 = por %p72, %p73
      %p75 = scmp.ne.s32.totalorder %s67, %s70
      %p76 = scmp.eq.s32.totalorder %s10, 0
      %p77 = por %p75, %p76
      %p78 = scmp.ne.s32.totalorder %s67, %s70
      %p79 = scmp.eq.s32.totalorder %s15, 1
      %p80 = por %p78, %p79
      %p81 = scmp.ne.s32.totalorder %s70, %s71
      %p82 = scmp.eq.s32.totalorder %s15, 0
      %p83 = por %p81, %p82
      %p84 = scmp.ne.s32.totalorder %s70, %s71
      %p85 = scmp.eq.s32.totalorder %s16, 1
      %p86 = por %p84, %p85
      %p88 = scmp.ne.s32.totalorder %s71, %s87
      %p89 = scmp.eq.s32.totalorder %s16, 0
      %p90 = por %p88, %p89
      %s91 = ssub.s32 %s10, %s17
      %p92 = scmp.eq.s32.totalorder %s91, 0
      %s94 = sadd.s32 %s93, 1
      %s95 = scalar_select %p92, %s93, %s94
      %p98 = pneg %p92
      %p99 = scmp.eq.s32.totalorder %s10, 1
      %p100 = por %p98, %p99
      %p101 = scmp.ne.s32.totalorder %s93, %s96
      %p102 = scmp.eq.s32.totalorder %s10, 0
      %p103 = por %p101, %p102
      %p104 = scmp.ne.s32.totalorder %s93, %s96
      %p105 = scmp.eq.s32.totalorder %s15, 1
      %p106 = por %p104, %p105
      %p107 = scmp.ne.s32.totalorder %s96, %s97
      %p108 = scmp.eq.s32.totalorder %s15, 0
      %p109 = por %p107, %p108
      %p110 = scmp.ne.s32.totalorder %s96, %s97
      %p111 = scmp.eq.s32.totalorder %s16, 1
      %p112 = por %p110, %p111
      %p114 = scmp.ne.s32.totalorder %s97, %s113
      %p115 = scmp.eq.s32.totalorder %s16, 0
      %p116 = por %p114, %p115
      %p117 = scmp.le.s32.totalorder 1, %s10
      %p118 = scmp.lt.s32.totalorder %s10, 3
      %p119 = pnand %p117, %p118
      %p120 = pneg %p119
      // Predicated region
      $region9: #{relation_conv_block.2} parent=5 // pred_check
        _
      $region10: #{relation_conv_block.2} parent=5 // pred_check_branch
        %122 = sbr.rel (%p119) target = $region12
      $region11: #{relation_conv_block.2} parent=5 // pred_region
        %s123 = ssub.s32 %s10, 1
        // Predicated region
        $region13: #{relation_conv_block.2} parent=11 // pred_check
          %p124 = pneg %p57
        $region14: #{relation_conv_block.2} parent=11 // pred_check_branch
          %126 = sbr.rel (%p124) target = $region16
        $region15: #{relation_conv_block.2} parent=11 // pred_region
          _
        $region16: #{relation_conv_block.2} parent=11 // pred_fallthru
          _
      $region12: #{relation_conv_block.2} parent=5 // pred_fallthru
        _
      %p127 = scmp.lt.s32.totalorder %s10, 2
      // Predicated region
      $region17: #{relation_conv_block.2} parent=5 // pred_check
        %p128 = pneg %p127
      $region18: #{relation_conv_block.2} parent=5 // pred_check_branch
        %130 = sbr.rel (%p128) target = $region20
      $region19: #{relation_conv_block.2} parent=5 // pred_region
        // Predicated region
        $region21: #{relation_conv_block.2} parent=19 // pred_check
          %p131 = pneg %p30
        $region22: #{relation_conv_block.2} parent=19 // pred_check_branch
          %133 = sbr.rel (%p131) target = $region24
        $region23: #{relation_conv_block.2} parent=19 // pred_region
          %s134 = sand.u32 %s20, 1
          %s135 = sand.u32 %s20, 1
          %s136 = smul.addr %s135, 112
          %s137 = scalar_lea.vmem [#allocation2], %s136
          %s138 = smul.u32 7, %s10
          %s139 = smul.addr %s138, 4
          %s140 = scalar_lea.vmem %s0, %s139
          // Predicated region
          $region25: #{relation_conv_block.2} parent=23 // pred_check
            _
          $region26: #{relation_conv_block.2} parent=23 // pred_check_branch
            %142 = sbr.rel (0) target = $region28
          $region27: #{relation_conv_block.2} parent=23 // pred_region
            // Predicated region
            $region29: #{relation_conv_block.2} parent=27 // pred_check
              _
            $region30: #{relation_conv_block.2} parent=27 // pred_check_branch
              %144 = sbr.rel target = $region32
            $region31: #{relation_conv_block.2} parent=27 // pred_region
              // Predicated region
              $region44: #{relation_conv_block.2} parent=31 // pred_check
                _
              $region45: #{relation_conv_block.2} parent=31 // pred_check_branch
                %214 = sbr.rel (0) target = $region47
              $region46: #{relation_conv_block.2} parent=31 // pred_region
                loop: start=0, step=1, limit=1
                $region48: #{relation_conv_block.2} parent=46 // loop_pre_header
                  _
                $region49: #{relation_conv_block.2} parent=46 // loop_header
                  %s216 = sphi 0, %s220
                  %p217 = scmp.ge.s32.totalorder %s216, 1
                  %s221 = sphi %s140, %s140
                  %s222 = sphi %s137, %s137
                $region50: #{relation_conv_block.2} parent=46 // loop_header_branch
                  %219 = sbr.rel (%p217) target = $region54
                $region51: #{relation_conv_block.2} parent=46 // loop_body
                  _
                $region52: #{relation_conv_block.2} parent=46 // loop_footer
                  %s220 = sadd.s32 1, %s216
                $region53: #{relation_conv_block.2} parent=46 // loop_footer_branch
                  %215 = sbr.rel target = $region49
                $region54: #{relation_conv_block.2} parent=46 // loop_exit
                  _
                %s224 = ssub.s32 16, 1
                loop: start=0, step=1, limit=1
                $region55: #{relation_conv_block.2} parent=46 // loop_pre_header
                  _
                $region56: #{relation_conv_block.2} parent=46 // loop_header
                  %s226 = sphi 0, %s230
                  %p227 = scmp.ge.s32.totalorder %s226, 1
                  %s231 = sphi %s140, %s140
                  %s232 = sphi %s137, %s137
                $region57: #{relation_conv_block.2} parent=46 // loop_header_branch
                  %229 = sbr.rel (%p227) target = $region61
                $region58: #{relation_conv_block.2} parent=46 // loop_body
                  %v233 = vld [vmem:[%s231] sm:%s224]
                  %234 = vst [vmem:[%s232] sm:%s224] %v233
                  %v235 = vld [vmem:[%s231 + $0x4] sm:%s224]
                  %236 = vst [vmem:[%s232 + $0x4] sm:%s224] %v235
                  %v237 = vld [vmem:[%s231 + $0x8] sm:%s224]
                  %238 = vst [vmem:[%s232 + $0x8] sm:%s224] %v237
                  %v239 = vld [vmem:[%s231 + $0xc] sm:%s224]
                  %240 = vst [vmem:[%s232 + $0xc] sm:%s224] %v239
                  %v241 = vld [vmem:[%s231 + $0x10] sm:%s224]
                  %242 = vst [vmem:[%s232 + $0x10] sm:%s224] %v241
                  %v243 = vld [vmem:[%s231 + $0x14] sm:%s224]
                  %244 = vst [vmem:[%s232 + $0x14] sm:%s224] %v243
                  %v245 = vld [vmem:[%s231 + $0x18] sm:%s224]
                  %246 = vst [vmem:[%s232 + $0x18] sm:%s224] %v245
                  %v247 = vld [vmem:[%s231 + $0x38] sm:%s224]
                  %248 = vst [vmem:[%s232 + $0x1c] sm:%s224] %v247
                  %v249 = vld [vmem:[%s231 + $0x3c] sm:%s224]
                  %250 = vst [vmem:[%s232 + $0x20] sm:%s224] %v249
                  %v251 = vld [vmem:[%s231 + $0x40] sm:%s224]
                  %252 = vst [vmem:[%s232 + $0x24] sm:%s224] %v251
                  %v253 = vld [vmem:[%s231 + $0x44] sm:%s224]
                  %254 = vst [vmem:[%s232 + $0x28] sm:%s224] %v253
                  %v255 = vld [vmem:[%s231 + $0x48] sm:%s224]
                  %256 = vst [vmem:[%s232 + $0x2c] sm:%s224] %v255
                  %v257 = vld [vmem:[%s231 + $0x4c] sm:%s224]
                  %258 = vst [vmem:[%s232 + $0x30] sm:%s224] %v257
                  %v259 = vld [vmem:[%s231 + $0x50] sm:%s224]
                  %260 = vst [vmem:[%s232 + $0x34] sm:%s224] %v259
                  %v261 = vld [vmem:[%s231 + $0x70] sm:%s224]
                  %262 = vst [vmem:[%s232 + $0x38] sm:%s224] %v261
                  %v263 = vld [vmem:[%s231 + $0x74] sm:%s224]
                  %264 = vst [vmem:[%s232 + $0x3c] sm:%s224] %v263
                  %v265 = vld [vmem:[%s231 + $0x78] sm:%s224]
                  %266 = vst [vmem:[%s232 + $0x40] sm:%s224] %v265
                  %v267 = vld [vmem:[%s231 + $0x7c] sm:%s224]
                  %268 = vst [vmem:[%s232 + $0x44] sm:%s224] %v267
                  %v269 = vld [vmem:[%s231 + $0x80] sm:%s224]
                  %270 = vst [vmem:[%s232 + $0x48] sm:%s224] %v269
                  %v271 = vld [vmem:[%s231 + $0x84] sm:%s224]
                  %272 = vst [vmem:[%s232 + $0x4c] sm:%s224] %v271
                  %v273 = vld [vmem:[%s231 + $0x88] sm:%s224]
                  %274 = vst [vmem:[%s232 + $0x50] sm:%s224] %v273
                  %v275 = vld [vmem:[%s231 + $0xa8] sm:%s224]
                  %276 = vst [vmem:[%s232 + $0x54] sm:%s224] %v275
                  %v277 = vld [vmem:[%s231 + $0xac] sm:%s224]
                  %278 = vst [vmem:[%s232 + $0x58] sm:%s224] %v277
                  %v279 = vld [vmem:[%s231 + $0xb0] sm:%s224]
                  %280 = vst [vmem:[%s232 + $0x5c] sm:%s224] %v279
                  %v281 = vld [vmem:[%s231 + $0xb4] sm:%s224]
                  %282 = vst [vmem:[%s232 + $0x60] sm:%s224] %v281
                  %v283 = vld [vmem:[%s231 + $0xb8] sm:%s224]
                  %284 = vst [vmem:[%s232 + $0x64] sm:%s224] %v283
                  %v285 = vld [vmem:[%s231 + $0xbc] sm:%s224]
                  %286 = vst [vmem:[%s232 + $0x68] sm:%s224] %v285
                  %v287 = vld [vmem:[%s231 + $0xc0] sm:%s224]
                  %288 = vst [vmem:[%s232 + $0x6c] sm:%s224] %v287
                $region59: #{relation_conv_block.2} parent=46 // loop_footer
                  %s230 = sadd.s32 1, %s226
                $region60: #{relation_conv_block.2} parent=46 // loop_footer_branch
                  %225 = sbr.rel target = $region56
                $region61: #{relation_conv_block.2} parent=46 // loop_exit
                  _
              $region47: #{relation_conv_block.2} parent=31 // pred_fallthru
                _
            $region32: #{relation_conv_block.2} parent=27 // pred_fallthru
              _
            // Predicated region
            $region33: #{relation_conv_block.2} parent=27 // pred_check
              _
            $region34: #{relation_conv_block.2} parent=27 // pred_check_branch
              %146 = sbr.rel (0) target = $region36
            $region35: #{relation_conv_block.2} parent=27 // pred_region
              %s148 = ssub.s32 16, 1
              loop: start=0, step=1, limit=1
              $region37: #{relation_conv_block.2} parent=35 // loop_pre_header
                _
              $region38: #{relation_conv_block.2} parent=35 // loop_header
                %s150 = sphi 0, %s154
                %p151 = scmp.ge.s32.totalorder %s150, 1
                %s155 = sphi %s140, %s140
                %s156 = sphi %s137, %s137
              $region39: #{relation_conv_block.2} parent=35 // loop_header_branch
                %153 = sbr.rel (%p151) target = $region43
              $region40: #{relation_conv_block.2} parent=35 // loop_body
                %v157 = vld [vmem:[%s155] sm:%s148]
                %158 = vst [vmem:[%s156] sm:%s148] %v157
                %v159 = vld [vmem:[%s155 + $0x4] sm:%s148]
                %160 = vst [vmem:[%s156 + $0x4] sm:%s148] %v159
                %v161 = vld [vmem:[%s155 + $0x8] sm:%s148]
                %162 = vst [vmem:[%s156 + $0x8] sm:%s148] %v161
                %v163 = vld [vmem:[%s155 + $0xc] sm:%s148]
                %164 = vst [vmem:[%s156 + $0xc] sm:%s148] %v163
                %v165 = vld [vmem:[%s155 + $0x10] sm:%s148]
                %166 = vst [vmem:[%s156 + $0x10] sm:%s148] %v165
                %v167 = vld [vmem:[%s155 + $0x14] sm:%s148]
                %168 = vst [vmem:[%s156 + $0x14] sm:%s148] %v167
                %v169 = vld [vmem:[%s155 + $0x18] sm:%s148]
                %170 = vst [vmem:[%s156 + $0x18] sm:%s148] %v169
                %v171 = vld [vmem:[%s155 + $0x38] sm:%s148]
                %172 = vst [vmem:[%s156 + $0x1c] sm:%s148] %v171
                %v173 = vld [vmem:[%s155 + $0x3c] sm:%s148]
                %174 = vst [vmem:[%s156 + $0x20] sm:%s148] %v173
                %v175 = vld [vmem:[%s155 + $0x40] sm:%s148]
                %176 = vst [vmem:[%s156 + $0x24] sm:%s148] %v175
                %v177 = vld [vmem:[%s155 + $0x44] sm:%s148]
                %178 = vst [vmem:[%s156 + $0x28] sm:%s148] %v177
                %v179 = vld [vmem:[%s155 + $0x48] sm:%s148]
                %180 = vst [vmem:[%s156 + $0x2c] sm:%s148] %v179
                %v181 = vld [vmem:[%s155 + $0x4c] sm:%s148]
                %182 = vst [vmem:[%s156 + $0x30] sm:%s148] %v181
                %v183 = vld [vmem:[%s155 + $0x50] sm:%s148]
                %184 = vst [vmem:[%s156 + $0x34] sm:%s148] %v183
                %v185 = vld [vmem:[%s155 + $0x70] sm:%s148]
                %186 = vst [vmem:[%s156 + $0x38] sm:%s148] %v185
                %v187 = vld [vmem:[%s155 + $0x74] sm:%s148]
                %188 = vst [vmem:[%s156 + $0x3c] sm:%s148] %v187
                %v189 = vld [vmem:[%s155 + $0x78] sm:%s148]
                %190 = vst [vmem:[%s156 + $0x40] sm:%s148] %v189
                %v191 = vld [vmem:[%s155 + $0x7c] sm:%s148]
                %192 = vst [vmem:[%s156 + $0x44] sm:%s148] %v191
                %v193 = vld [vmem:[%s155 + $0x80] sm:%s148]
                %194 = vst [vmem:[%s156 + $0x48] sm:%s148] %v193
                %v195 = vld [vmem:[%s155 + $0x84] sm:%s148]
                %196 = vst [vmem:[%s156 + $0x4c] sm:%s148] %v195
                %v197 = vld [vmem:[%s155 + $0x88] sm:%s148]
                %198 = vst [vmem:[%s156 + $0x50] sm:%s148] %v197
                %v199 = vld [vmem:[%s155 + $0xa8] sm:%s148]
                %200 = vst [vmem:[%s156 + $0x54] sm:%s148] %v199
                %v201 = vld [vmem:[%s155 + $0xac] sm:%s148]
                %202 = vst [vmem:[%s156 + $0x58] sm:%s148] %v201
                %v203 = vld [vmem:[%s155 + $0xb0] sm:%s148]
                %204 = vst [vmem:[%s156 + $0x5c] sm:%s148] %v203
                %v205 = vld [vmem:[%s155 + $0xb4] sm:%s148]
                %206 = vst [vmem:[%s156 + $0x60] sm:%s148] %v205
                %v207 = vld [vmem:[%s155 + $0xb8] sm:%s148]
                %208 = vst [vmem:[%s156 + $0x64] sm:%s148] %v207
                %v209 = vld [vmem:[%s155 + $0xbc] sm:%s148]
                %210 = vst [vmem:[%s156 + $0x68] sm:%s148] %v209
                %v211 = vld [vmem:[%s155 + $0xc0] sm:%s148]
                %212 = vst [vmem:[%s156 + $0x6c] sm:%s148] %v211
              $region41: #{relation_conv_block.2} parent=35 // loop_footer
                %s154 = sadd.s32 1, %s150
              $region42: #{relation_conv_block.2} parent=35 // loop_footer_branch
                %149 = sbr.rel target = $region38
              $region43: #{relation_conv_block.2} parent=35 // loop_exit
                _
            $region36: #{relation_conv_block.2} parent=27 // pred_fallthru
              _
          $region28: #{relation_conv_block.2} parent=23 // pred_fallthru
            _
          %289 = vnop
        $region24: #{relation_conv_block.2} parent=19 // pred_fallthru
          _
      $region20: #{relation_conv_block.2} parent=5 // pred_fallthru
        _
      %p290 = scmp.le.s32.totalorder 1, %s10
      %p291 = scmp.lt.s32.totalorder %s10, 3
      %p292 = pnand %p290, %p291
      %p293 = pneg %p292
      // Predicated region
      $region62: #{relation_conv_block.2} parent=5 // pred_check
        _
      $region63: #{relation_conv_block.2} parent=5 // pred_check_branch
        %295 = sbr.rel (%p292) target = $region65
      $region64: #{relation_conv_block.2} parent=5 // pred_region
        %s296 = ssub.s32 %s10, 1
        %s297 = sand.u32 %s23, 1
        %s298 = sand.u32 %s23, 1
        %s299 = smul.addr %s298, 112
        %s300 = scalar_lea.vmem [#allocation2], %s299
        // Predicated region
        $region66: #{relation_conv_block.2} parent=64 // pred_check
          %p301 = pneg %p36
        $region67: #{relation_conv_block.2} parent=64 // pred_check_branch
          %303 = sbr.rel (%p301) target = $region69
        $region68: #{relation_conv_block.2} parent=64 // pred_region
          _
        $region69: #{relation_conv_block.2} parent=64 // pred_fallthru
          _
        %s304 = sand.u32 %s23, 1
        %s305 = sand.u32 %s23, 1
        %s306 = smul.addr %s305, 112
        %s307 = scalar_lea.vmem [#allocation2], %s306
        %p308 = pneg %p36
        %p309 = pneg %p33
        %p310 = pneg %p57
        %p311 = pneg %p54
        %p312 = pneg %p83
        %p313 = pneg %p80
        %p314 = scmp.lt.s32.totalorder %s15, 1
        %s315 = scalar_select %p314, %s15, 1
        %s316 = scalar_lea.vmem %s2, %s315
        %p317 = pneg %p109
        %p318 = pneg %p106
        %p319 = scmp.lt.s32.totalorder %s15, 1
        %s320 = scalar_select %p319, %s15, 1
        %s321 = scalar_lea.vmem %s3, %s320
        %s322 = smul.u32 7, %s15
        %p323 = scmp.lt.s32.totalorder %s15, 1
        %s324 = scalar_select %p323, %s15, 1
        %s325 = scalar_lea.vmem %s2, %s324
        %p326 = scmp.lt.s32.totalorder %s15, 1
        %s327 = scalar_select %p326, %s15, 1
        %s328 = scalar_lea.vmem %s3, %s327
        %v330 = vld [vmem:[%s1] sm:$0xf]
        %v331 = vld [vmem:[%s1 + $0x4] sm:$0xf]
        %v332 = vld [vmem:[%s1 + $0x8] sm:$0xf]
        %v333 = vld [vmem:[%s1 + $0xc] sm:$0xf]
        %v334 = vld [vmem:[%s1 + $0x10] sm:$0x3]
        %v335 = vld [vmem:[%s300] sm:$0xf]
        %v336 = vld [vmem:[%s300 + $0x4] sm:$0xf]
        %v337 = vld [vmem:[%s300 + $0x8] sm:$0xf]
        %v338 = vld [vmem:[%s300 + $0xc] sm:$0xf]
        %v339 = vld [vmem:[%s300 + $0x10] sm:$0xf]
        %v340 = vld [vmem:[%s300 + $0x14] sm:$0xf]
        %v341 = vld [vmem:[%s300 + $0x18] sm:$0xf]
        %v349 = vunpack.c.l.b16 %v335
        %v350 = vunpack.c.l.b16 %v336
        %v351 = vunpack.c.l.b16 %v337
        %v352 = vunpack.c.l.b16 %v338
        %v353 = vunpack.c.l.b16 %v339
        %v354 = vunpack.c.l.b16 %v340
        %v355 = vunpack.c.l.b16 %v341
        %v356 = vpack.c.b16 %v350, %v349
        %v357 = vpack.c.b16 %v352, %v351
        %v358 = vpack.c.b16 %v354, %v353
        %v359 = vpack.c.b16 %v355, %v355
        %v365 = vunpack.c.l.b16 %v330
        %v366 = vunpack.c.l.b16 %v331
        %v367 = vunpack.c.l.b16 %v332
        %v368 = vunpack.c.l.b16 %v333
        %v369 = vunpack.c.l.b16 %v334
        %v370 = vpack.c.b16 %v366, %v365
        %v371 = vpack.c.b16 %v368, %v367
        %v372 = vpack.c.b16 %v369, %v369
        %vm375 = vcmask 293888
        %v377 = vsel %vm375, %v356, 0
        %v380 = vsel %vm375, %v357, 0
        %v383 = vsel %vm375, %v358, 0
        %v386 = vsel %vm375, %v359, 0
        %vm388 = vcmask 1041408
        %v390 = vsel %vm388, %v372, 0
        %392 = vmatpush.bf16.msra.mxu0 0
        %393 = vmatpush.bf16.msra.mxu0 0
        %394 = vmatpush.bf16.msra.mxu0 0
        %395 = vmatpush.bf16.msra.mxu0 0
        %396 = vmatpush.bf16.msra.mxu0 0
        %397 = vmatpush.bf16.msra.mxu0 %v390
        %398 = vmatpush.bf16.msra.mxu0 %v371
        %399 = vmatpush.bf16.msra.mxu0 %v370
        %400 = vmatmul.bf16.gmra.mxu0 %v377
        %v401 = vpop.f32.mrf.mxu0
        %v402 = vadd.f32 0.0, %v401
        %v403 = vpop.f32.mrf.mxu0
        %v404 = vadd.f32 0.0, %v403
        %405 = vmatmul.bf16.gmra.mxu0 %v380
        %v406 = vpop.f32.mrf.mxu0
        %v407 = vadd.f32 0.0, %v406
        %v408 = vpop.f32.mrf.mxu0
        %v409 = vadd.f32 0.0, %v408
        %410 = vmatmul.bf16.gmra.mxu0 %v383
        %v411 = vpop.f32.mrf.mxu0
        %v412 = vadd.f32 0.0, %v411
        %v413 = vpop.f32.mrf.mxu0
        %v414 = vadd.f32 0.0, %v413
        %415 = vmatmul.bf16.gmra.mxu0 %v386
        %v416 = vpop.f32.mrf.mxu0
        %v417 = vadd.f32 0.0, %v416
        %v418 = vpop.f32.mrf.mxu0
        %419 = vdwg.mxu0
        %v420 = vadd.f32 %v402, %v404
        %v421 = vadd.f32 %v420, %v407
        %v422 = vadd.f32 %v421, %v409
        %v423 = vadd.f32 %v422, %v412
        %v424 = vadd.f32 %v423, %v414
        %v425 = vadd.f32 %v424, %v417
        %v426 = vrot.slane %v425, 4
        %v427 = vadd.f32 %v425, %v426
        %v428 = vrot.slane %v427, 2
        %v429 = vadd.f32 %v427, %v428
        %v430 = vrot.slane %v429, 1
        %v431 = vadd.f32 %v429, %v430
        %v432 = vadd.f32 %v431, 0.0
        %v433 = vmul.f32 %v402, %v402
        %v434 = vmul.f32 %v404, %v404
        %v435 = vmul.f32 %v407, %v407
        %v436 = vmul.f32 %v409, %v409
        %v437 = vmul.f32 %v412, %v412
        %v438 = vmul.f32 %v414, %v414
        %v439 = vmul.f32 %v417, %v417
        %v440 = vadd.f32 %v433, %v434
        %v441 = vadd.f32 %v440, %v435
        %v442 = vadd.f32 %v441, %v436
        %v443 = vadd.f32 %v442, %v437
        %v444 = vadd.f32 %v443, %v438
        %v445 = vadd.f32 %v444, %v439
        %v446 = vrot.slane %v445, 4
        %v447 = vadd.f32 %v445, %v446
        %v448 = vrot.slane %v447, 2
        %v449 = vadd.f32 %v447, %v448
        %v450 = vrot.slane %v449, 1
        %v451 = vadd.f32 %v449, %v450
        %v452 = vadd.f32 %v451, 0.0
        %s453 = scalar_lea.vmem %s300, 28 [#allocation2]
        %v454 = vld [vmem:[%s453] sm:$0xf]
        %v455 = vld [vmem:[%s453 + $0x4] sm:$0xf]
        %v456 = vld [vmem:[%s453 + $0x8] sm:$0xf]
        %v457 = vld [vmem:[%s453 + $0xc] sm:$0xf]
        %v458 = vld [vmem:[%s453 + $0x10] sm:$0xf]
        %v459 = vld [vmem:[%s453 + $0x14] sm:$0xf]
        %v460 = vld [vmem:[%s453 + $0x18] sm:$0xf]
        %v468 = vunpack.c.l.b16 %v454
        %v469 = vunpack.c.l.b16 %v455
        %v470 = vunpack.c.l.b16 %v456
        %v471 = vunpack.c.l.b16 %v457
        %v472 = vunpack.c.l.b16 %v458
        %v473 = vunpack.c.l.b16 %v459
        %v474 = vunpack.c.l.b16 %v460
        %v475 = vpack.c.b16 %v469, %v468
        %v476 = vpack.c.b16 %v471, %v470
        %v477 = vpack.c.b16 %v473, %v472
        %v478 = vpack.c.b16 %v474, %v474
        %v480 = vsel %vm375, %v475, 0
        %v483 = vsel %vm375, %v476, 0
        %v486 = vsel %vm375, %v477, 0
        %v489 = vsel %vm375, %v478, 0
        %491 = vmatpush.bf16.msra.mxu0 0
        %492 = vmatpush.bf16.msra.mxu0 0
        %493 = vmatpush.bf16.msra.mxu0 0
        %494 = vmatpush.bf16.msra.mxu0 0
        %495 = vmatpush.bf16.msra.mxu0 0
        %496 = vmatpush.bf16.msra.mxu0 %v390
        %497 = vmatpush.bf16.msra.mxu0 %v371
        %498 = vmatpush.bf16.msra.mxu0 %v370
        %499 = vmatmul.bf16.gmra.mxu0 %v480
        %v500 = vpop.f32.mrf.mxu0
        %v501 = vadd.f32 0.0, %v500
        %v502 = vpop.f32.mrf.mxu0
        %v503 = vadd.f32 0.0, %v502
        %504 = vmatmul.bf16.gmra.mxu0 %v483
        %v505 = vpop.f32.mrf.mxu0
        %v506 = vadd.f32 0.0, %v505
        %v507 = vpop.f32.mrf.mxu0
        %v508 = vadd.f32 0.0, %v507
        %509 = vmatmul.bf16.gmra.mxu0 %v486
        %v510 = vpop.f32.mrf.mxu0
        %v511 = vadd.f32 0.0, %v510
        %v512 = vpop.f32.mrf.mxu0
        %v513 = vadd.f32 0.0, %v512
        %514 = vmatmul.bf16.gmra.mxu0 %v489
        %v515 = vpop.f32.mrf.mxu0
        %v516 = vadd.f32 0.0, %v515
        %v517 = vpop.f32.mrf.mxu0
        %518 = vdwg.mxu0
        %v519 = vadd.f32 %v501, %v503
        %v520 = vadd.f32 %v519, %v506
        %v521 = vadd.f32 %v520, %v508
        %v522 = vadd.f32 %v521, %v511
        %v523 = vadd.f32 %v522, %v513
        %v524 = vadd.f32 %v523, %v516
        %v525 = vrot.slane %v524, 4
        %v526 = vadd.f32 %v524, %v525
        %v527 = vrot.slane %v526, 2
        %v528 = vadd.f32 %v526, %v527
        %v529 = vrot.slane %v528, 1
        %v530 = vadd.f32 %v528, %v529
        %v531 = vadd.f32 %v432, %v530
        %v532 = vmul.f32 %v501, %v501
        %v533 = vmul.f32 %v503, %v503
        %v534 = vmul.f32 %v506, %v506
        %v535 = vmul.f32 %v508, %v508
        %v536 = vmul.f32 %v511, %v511
        %v537 = vmul.f32 %v513, %v513
        %v538 = vmul.f32 %v516, %v516
        %v539 = vadd.f32 %v532, %v533
        %v540 = vadd.f32 %v539, %v534
        %v541 = vadd.f32 %v540, %v535
        %v542 = vadd.f32 %v541, %v536
        %v543 = vadd.f32 %v542, %v537
        %v544 = vadd.f32 %v543, %v538
        %v545 = vrot.slane %v544, 4
        %v546 = vadd.f32 %v544, %v545
        %v547 = vrot.slane %v546, 2
        %v548 = vadd.f32 %v546, %v547
        %v549 = vrot.slane %v548, 1
        %v550 = vadd.f32 %v548, %v549
        %v551 = vadd.f32 %v452, %v550
        %s552 = scalar_lea.vmem %s300, 56 [#allocation2]
        %v553 = vld [vmem:[%s552] sm:$0xf]
        %v554 = vld [vmem:[%s552 + $0x4] sm:$0xf]
        %v555 = vld [vmem:[%s552 + $0x8] sm:$0xf]
        %v556 = vld [vmem:[%s552 + $0xc] sm:$0xf]
        %v557 = vld [vmem:[%s552 + $0x10] sm:$0xf]
        %v558 = vld [vmem:[%s552 + $0x14] sm:$0xf]
        %v559 = vld [vmem:[%s552 + $0x18] sm:$0xf]
        %v567 = vunpack.c.l.b16 %v553
        %v568 = vunpack.c.l.b16 %v554
        %v569 = vunpack.c.l.b16 %v555
        %v570 = vunpack.c.l.b16 %v556
        %v571 = vunpack.c.l.b16 %v557
        %v572 = vunpack.c.l.b16 %v558
        %v573 = vunpack.c.l.b16 %v559
        %v574 = vpack.c.b16 %v568, %v567
        %v575 = vpack.c.b16 %v570, %v569
        %v576 = vpack.c.b16 %v572, %v571
        %v577 = vpack.c.b16 %v573, %v573
        %v579 = vsel %vm375, %v574, 0
        %v582 = vsel %vm375, %v575, 0
        %v585 = vsel %vm375, %v576, 0
        %v588 = vsel %vm375, %v577, 0
        %590 = vmatpush.bf16.msra.mxu0 0
        %591 = vmatpush.bf16.msra.mxu0 0
        %592 = vmatpush.bf16.msra.mxu0 0
        %593 = vmatpush.bf16.msra.mxu0 0
        %594 = vmatpush.bf16.msra.mxu0 0
        %595 = vmatpush.bf16.msra.mxu0 %v390
        %596 = vmatpush.bf16.msra.mxu0 %v371
        %597 = vmatpush.bf16.msra.mxu0 %v370
        %598 = vmatmul.bf16.gmra.mxu0 %v579
        %v599 = vpop.f32.mrf.mxu0
        %v600 = vadd.f32 0.0, %v599
        %v601 = vpop.f32.mrf.mxu0
        %v602 = vadd.f32 0.0, %v601
        %603 = vmatmul.bf16.gmra.mxu0 %v582
        %v604 = vpop.f32.mrf.mxu0
        %v605 = vadd.f32 0.0, %v604
        %v606 = vpop.f32.mrf.mxu0
        %v607 = vadd.f32 0.0, %v606
        %608 = vmatmul.bf16.gmra.mxu0 %v585
        %v609 = vpop.f32.mrf.mxu0
        %v610 = vadd.f32 0.0, %v609
        %v611 = vpop.f32.mrf.mxu0
        %v612 = vadd.f32 0.0, %v611
        %613 = vmatmul.bf16.gmra.mxu0 %v588
        %v614 = vpop.f32.mrf.mxu0
        %v615 = vadd.f32 0.0, %v614
        %v616 = vpop.f32.mrf.mxu0
        %617 = vdwg.mxu0
        %v618 = vadd.f32 %v600, %v602
        %v619 = vadd.f32 %v618, %v605
        %v620 = vadd.f32 %v619, %v607
        %v621 = vadd.f32 %v620, %v610
        %v622 = vadd.f32 %v621, %v612
        %v623 = vadd.f32 %v622, %v615
        %v624 = vrot.slane %v623, 4
        %v625 = vadd.f32 %v623, %v624
        %v626 = vrot.slane %v625, 2
        %v627 = vadd.f32 %v625, %v626
        %v628 = vrot.slane %v627, 1
        %v629 = vadd.f32 %v627, %v628
        %v630 = vadd.f32 %v531, %v629
        %v631 = vmul.f32 %v600, %v600
        %v632 = vmul.f32 %v602, %v602
        %v633 = vmul.f32 %v605, %v605
        %v634 = vmul.f32 %v607, %v607
        %v635 = vmul.f32 %v610, %v610
        %v636 = vmul.f32 %v612, %v612
        %v637 = vmul.f32 %v615, %v615
        %v638 = vadd.f32 %v631, %v632
        %v639 = vadd.f32 %v638, %v633
        %v640 = vadd.f32 %v639, %v634
        %v641 = vadd.f32 %v640, %v635
        %v642 = vadd.f32 %v641, %v636
        %v643 = vadd.f32 %v642, %v637
        %v644 = vrot.slane %v643, 4
        %v645 = vadd.f32 %v643, %v644
        %v646 = vrot.slane %v645, 2
        %v647 = vadd.f32 %v645, %v646
        %v648 = vrot.slane %v647, 1
        %v649 = vadd.f32 %v647, %v648
        %v650 = vadd.f32 %v551, %v649
        %s651 = scalar_lea.vmem %s300, 84 [#allocation2]
        %v652 = vld [vmem:[%s651] sm:$0xf]
        %v653 = vld [vmem:[%s651 + $0x4] sm:$0xf]
        %v654 = vld [vmem:[%s651 + $0x8] sm:$0xf]
        %v655 = vld [vmem:[%s651 + $0xc] sm:$0xf]
        %v656 = vld [vmem:[%s651 + $0x10] sm:$0xf]
        %v657 = vld [vmem:[%s651 + $0x14] sm:$0xf]
        %v658 = vld [vmem:[%s651 + $0x18] sm:$0xf]
        %v666 = vunpack.c.l.b16 %v652
        %v667 = vunpack.c.l.b16 %v653
        %v668 = vunpack.c.l.b16 %v654
        %v669 = vunpack.c.l.b16 %v655
        %v670 = vunpack.c.l.b16 %v656
        %v671 = vunpack.c.l.b16 %v657
        %v672 = vunpack.c.l.b16 %v658
        %v673 = vpack.c.b16 %v667, %v666
        %v674 = vpack.c.b16 %v669, %v668
        %v675 = vpack.c.b16 %v671, %v670
        %v676 = vpack.c.b16 %v672, %v672
        %v678 = vsel %vm375, %v673, 0
        %v681 = vsel %vm375, %v674, 0
        %v684 = vsel %vm375, %v675, 0
        %v687 = vsel %vm375, %v676, 0
        %689 = vmatpush.bf16.msra.mxu0 0
        %690 = vmatpush.bf16.msra.mxu0 0
        %691 = vmatpush.bf16.msra.mxu0 0
        %692 = vmatpush.bf16.msra.mxu0 0
        %693 = vmatpush.bf16.msra.mxu0 0
        %694 = vmatpush.bf16.msra.mxu0 %v390
        %695 = vmatpush.bf16.msra.mxu0 %v371
        %696 = vmatpush.bf16.msra.mxu0 %v370
        %697 = vmatmul.bf16.gmra.mxu0 %v678
        %v698 = vpop.f32.mrf.mxu0
        %v699 = vadd.f32 0.0, %v698
        %v700 = vpop.f32.mrf.mxu0
        %v701 = vadd.f32 0.0, %v700
        %702 = vmatmul.bf16.gmra.mxu0 %v681
        %v703 = vpop.f32.mrf.mxu0
        %v704 = vadd.f32 0.0, %v703
        %v705 = vpop.f32.mrf.mxu0
        %v706 = vadd.f32 0.0, %v705
        %707 = vmatmul.bf16.gmra.mxu0 %v684
        %v708 = vpop.f32.mrf.mxu0
        %v709 = vadd.f32 0.0, %v708
        %v710 = vpop.f32.mrf.mxu0
        %v711 = vadd.f32 0.0, %v710
        %712 = vmatmul.bf16.gmra.mxu0 %v687
        %v713 = vpop.f32.mrf.mxu0
        %v714 = vadd.f32 0.0, %v713
        %v715 = vpop.f32.mrf.mxu0
        %716 = vdwg.mxu0
        %v717 = vadd.f32 %v699, %v701
        %v718 = vadd.f32 %v717, %v704
        %v719 = vadd.f32 %v718, %v706
        %v720 = vadd.f32 %v719, %v709
        %v721 = vadd.f32 %v720, %v711
        %v722 = vadd.f32 %v721, %v714
        %v723 = vrot.slane %v722, 4
        %v724 = vadd.f32 %v722, %v723
        %v725 = vrot.slane %v724, 2
        %v726 = vadd.f32 %v724, %v725
        %v727 = vrot.slane %v726, 1
        %v728 = vadd.f32 %v726, %v727
        %v729 = vadd.f32 %v630, %v728
        %v730 = vmul.f32 %v699, %v699
        %v731 = vmul.f32 %v701, %v701
        %v732 = vmul.f32 %v704, %v704
        %v733 = vmul.f32 %v706, %v706
        %v734 = vmul.f32 %v709, %v709
        %v735 = vmul.f32 %v711, %v711
        %v736 = vmul.f32 %v714, %v714
        %v737 = vadd.f32 %v730, %v731
        %v738 = vadd.f32 %v737, %v732
        %v739 = vadd.f32 %v738, %v733
        %v740 = vadd.f32 %v739, %v734
        %v741 = vadd.f32 %v740, %v735
        %v742 = vadd.f32 %v741, %v736
        %v743 = vrot.slane %v742, 4
        %v744 = vadd.f32 %v742, %v743
        %v745 = vrot.slane %v744, 2
        %v746 = vadd.f32 %v744, %v745
        %v747 = vrot.slane %v746, 1
        %v748 = vadd.f32 %v746, %v747
        %v749 = vadd.f32 %v650, %v748
        %750 = vst [vmem:[%s325] sm:$0x1] %v729
        %751 = vst [vmem:[%s328] sm:$0x1] %v749
        %p752 = scmp.lt.s32.totalorder %s15, 1
        %s753 = scalar_select %p752, %s15, 1
        %s754 = scalar_lea.vmem %s2, %s753
        %p755 = scmp.lt.s32.totalorder %s15, 1
        %s756 = scalar_select %p755, %s15, 1
        %s757 = scalar_lea.vmem %s3, %s756
        // Predicated region
        $region70: #{relation_conv_block.2} parent=64 // pred_check
          %p758 = pneg %p80
        $region71: #{relation_conv_block.2} parent=64 // pred_check_branch
          %760 = sbr.rel (%p758) target = $region73
        $region72: #{relation_conv_block.2} parent=64 // pred_region
          _
        $region73: #{relation_conv_block.2} parent=64 // pred_fallthru
          _
        // Predicated region
        $region74: #{relation_conv_block.2} parent=64 // pred_check
          %p761 = pneg %p106
        $region75: #{relation_conv_block.2} parent=64 // pred_check_branch
          %763 = sbr.rel (%p761) target = $region77
        $region76: #{relation_conv_block.2} parent=64 // pred_region
          _
        $region77: #{relation_conv_block.2} parent=64 // pred_fallthru
          _
      $region65: #{relation_conv_block.2} parent=5 // pred_fallthru
        _
      %p764 = scmp.le.s32.totalorder 2, %s10
      // Predicated region
      $region78: #{relation_conv_block.2} parent=5 // pred_check
        %p765 = pneg %p764
      $region79: #{relation_conv_block.2} parent=5 // pred_check_branch
        %767 = sbr.rel (%p765) target = $region81
      $region80: #{relation_conv_block.2} parent=5 // pred_region
        %s768 = ssub.s32 %s10, 2
        // Predicated region
        $region82: #{relation_conv_block.2} parent=80 // pred_check
          %p769 = pneg %p86
        $region83: #{relation_conv_block.2} parent=80 // pred_check_branch
          %771 = sbr.rel (%p769) target = $region85
        $region84: #{relation_conv_block.2} parent=80 // pred_region
          %p772 = scmp.lt.s32.totalorder %s16, 1
          %s773 = scalar_select %p772, %s16, 1
          %s774 = scalar_lea.vmem %s2, %s773
        $region85: #{relation_conv_block.2} parent=80 // pred_fallthru
          _
        // Predicated region
        $region86: #{relation_conv_block.2} parent=80 // pred_check
          %p775 = pneg %p112
        $region87: #{relation_conv_block.2} parent=80 // pred_check_branch
          %777 = sbr.rel (%p775) target = $region89
        $region88: #{relation_conv_block.2} parent=80 // pred_region
          %p778 = scmp.lt.s32.totalorder %s16, 1
          %s779 = scalar_select %p778, %s16, 1
          %s780 = scalar_lea.vmem %s3, %s779
        $region89: #{relation_conv_block.2} parent=80 // pred_fallthru
          _
      $region81: #{relation_conv_block.2} parent=5 // pred_fallthru
        _
    $region6: #{relation_conv_block.2} parent=1 // loop_footer
      %s14 = sadd.s32 1, %s10
    $region7: #{relation_conv_block.2} parent=1 // loop_footer_branch
      %9 = sbr.rel target = $region3
    $region8: #{relation_conv_block.2} parent=1 // loop_exit
      _

// kernel: relation_conv_block.3
$region0: #{relation_conv_block.3}
  #allocation0 [shape = 'u32[]', space=smem, size = 0x4, offset = 0x4, fixed_abs, tag = 'smem constant byte address 0x4 - core index']
  #allocation1 [shape = 'u32[72,128]{1,0:T(1,128)}', space=vmem, size = 0x9000, scoped, tag = 'internal scratch']
  %s0 = inlined_call_operand.vmem [shape: bf16[4,112,36], index: 0, kind: input, shape index: {}]
  %s1 = inlined_call_operand.vmem [shape: bf16[36,128], index: 1, kind: input, shape index: {}]
  %s2 = inlined_call_operand.vmem [shape: f32[1,128], index: 2, kind: input, shape index: {}]
  %s3 = inlined_call_operand.vmem [shape: f32[1,128], index: 3, kind: input, shape index: {}]
  %s4 = inlined_call_operand.vmem [shape: f32[112,128], index: 4, kind: output, shape index: {}]
  %s5 = sld [smem:[#allocation0]]
  $region90: #{relation_conv_block.3} parent=0
    _
  %s7 = ssub.s32 1, %s5
  %s8 = scalar_select 0, %s7, %s5
  $region1: #{relation_conv_block.3} parent=0
    #allocation2 [shape = 'u8[114688]{0}', space=vmem, size = 0x1c000, scoped, tag = 'input window, operand 0']
    loop: start=0, step=1, limit=4
    $region2: #{relation_conv_block.3} parent=1 // loop_pre_header
      _
    $region3: #{relation_conv_block.3} parent=1 // loop_header
      %s10 = sphi 0, %s14
      %p11 = scmp.ge.s32.totalorder %s10, 4
      %s20 = sphi 0, %s22
      %s23 = sphi 0, %s20
      %s24 = sphi 0, %s23
      %s40 = sphi 0, %s24
      %s44 = sphi 0, %s44
      %s46 = sphi 0, %s44
      %s47 = sphi 0, %s46
      %s61 = sphi 0, %s47
      %s65 = sphi 0, %s65
      %s67 = sphi 0, %s65
      %s68 = sphi 0, %s67
      %s82 = sphi 0, %s68
      %s86 = sphi 0, %s86
      %s88 = sphi 0, %s86
      %s89 = sphi 0, %s88
      %s103 = sphi 0, %s89
      %s109 = sphi 0, %s111
      %s112 = sphi 0, %s109
      %s113 = sphi 0, %s112
      %s129 = sphi 0, %s113
    $region4: #{relation_conv_block.3} parent=1 // loop_header_branch
      %13 = sbr.rel (%p11) target = $region8
    $region5: #{relation_conv_block.3} parent=1 // loop_body
      %s15 = ssub.s32 %s10, 1
      %s16 = ssub.s32 %s10, 2
      %s17 = sadd.s32 %s10, 1
      %s18 = ssub.s32 %s10, %s17
      %p19 = scmp.eq.s32.totalorder %s18, 0
      %s21 = sadd.s32 %s20, 1
      %s22 = scalar_select %p19, %s20, %s21
      %p25 = pneg %p19
      %p26 = scmp.eq.s32.totalorder %s10, 1
      %p27 = por %p25, %p26
      %p28 = scmp.ne.s32.totalorder %s20, %s23
      %p29 = scmp.eq.s32.totalorder %s10, 0
      %p30 = por %p28, %p29
      %p31 = scmp.ne.s32.totalorder %s20, %s23
      %p32 = scmp.eq.s32.totalorder %s15, 1
      %p33 = por %p31, %p32
      %p34 = scmp.ne.s32.totalorder %s23, %s24
      %p35 = scmp.eq.s32.totalorder %s15, 0
      %p36 = por %p34, %p35
      %p37 = scmp.ne.s32.totalorder %s23, %s24
      %p38 = scmp.eq.s32.totalorder %s16, 1
      %p39 = por %p37, %p38
      %p41 = scmp.ne.s32.totalorder %s24, %s40
      %p42 = scmp.eq.s32.totalorder %s16, 0
      %p43 = por %p41, %p42
      %s45 = sadd.s32 %s44, 1
      %p48 = scmp.eq.s32.totalorder %s10, 1
      %p49 = scmp.ne.s32.totalorder %s44, %s46
      %p50 = scmp.eq.s32.totalorder %s10, 0
      %p51 = por %p49, %p50
      %p52 = scmp.ne.s32.totalorder %s44, %s46
      %p53 = scmp.eq.s32.totalorder %s15, 1
      %p54 = por %p52, %p53
      %p55 = scmp.ne.s32.totalorder %s46, %s47
      %p56 = scmp.eq.s32.totalorder %s15, 0
      %p57 = por %p55, %p56
      %p58 = scmp.ne.s32.totalorder %s46, %s47
      %p59 = scmp.eq.s32.totalorder %s16, 1
      %p60 = por %p58, %p59
      %p62 = scmp.ne.s32.totalorder %s47, %s61
      %p63 = scmp.eq.s32.totalorder %s16, 0
      %p64 = por %p62, %p63
      %s66 = sadd.s32 %s65, 1
      %p69 = scmp.eq.s32.totalorder %s10, 1
      %p70 = scmp.ne.s32.totalorder %s65, %s67
      %p71 = scmp.eq.s32.totalorder %s10, 0
      %p72 = por %p70, %p71
      %p73 = scmp.ne.s32.totalorder %s65, %s67
      %p74 = scmp.eq.s32.totalorder %s15, 1
      %p75 = por %p73, %p74
      %p76 = scmp.ne.s32.totalorder %s67, %s68
      %p77 = scmp.eq.s32.totalorder %s15, 0
      %p78 = por %p76, %p77
      %p79 = scmp.ne.s32.totalorder %s67, %s68
      %p80 = scmp.eq.s32.totalorder %s16, 1
      %p81 = por %p79, %p80
      %p83 = scmp.ne.s32.totalorder %s68, %s82
      %p84 = scmp.eq.s32.totalorder %s16, 0
      %p85 = por %p83, %p84
      %s87 = sadd.s32 %s86, 1
      %p90 = scmp.eq.s32.totalorder %s10, 1
      %p91 = scmp.ne.s32.totalorder %s86, %s88
      %p92 = scmp.eq.s32.totalorder %s10, 0
      %p93 = por %p91, %p92
      %p94 = scmp.ne.s32.totalorder %s86, %s88
      %p95 = scmp.eq.s32.totalorder %s15, 1
      %p96 = por %p94, %p95
      %p97 = scmp.ne.s32.totalorder %s88, %s89
      %p98 = scmp.eq.s32.totalorder %s15, 0
      %p99 = por %p97, %p98
      %p100 = scmp.ne.s32.totalorder %s88, %s89
      %p101 = scmp.eq.s32.totalorder %s16, 1
      %p102 = por %p100, %p101
      %p104 = scmp.ne.s32.totalorder %s89, %s103
      %p105 = scmp.eq.s32.totalorder %s16, 0
      %p106 = por %p104, %p105
      %s107 = ssub.s32 %s10, %s17
      %p108 = scmp.eq.s32.totalorder %s107, 0
      %s110 = sadd.s32 %s109, 1
      %s111 = scalar_select %p108, %s109, %s110
      %p114 = pneg %p108
      %p115 = scmp.eq.s32.totalorder %s10, 1
      %p116 = por %p114, %p115
      %p117 = scmp.ne.s32.totalorder %s109, %s112
      %p118 = scmp.eq.s32.totalorder %s10, 0
      %p119 = por %p117, %p118
      %p120 = scmp.ne.s32.totalorder %s109, %s112
      %p121 = scmp.eq.s32.totalorder %s15, 1
      %p122 = por %p120, %p121
      %p123 = scmp.ne.s32.totalorder %s112, %s113
      %p124 = scmp.eq.s32.totalorder %s15, 0
      %p125 = por %p123, %p124
      %p126 = scmp.ne.s32.totalorder %s112, %s113
      %p127 = scmp.eq.s32.totalorder %s16, 1
      %p128 = por %p126, %p127
      %p130 = scmp.ne.s32.totalorder %s113, %s129
      %p131 = scmp.eq.s32.totalorder %s16, 0
      %p132 = por %p130, %p131
      %p133 = scmp.le.s32.totalorder 1, %s10
      %p134 = scmp.lt.s32.totalorder %s10, 3
      %p135 = pnand %p133, %p134
      %p136 = pneg %p135
      // Predicated region
      $region9: #{relation_conv_block.3} parent=5 // pred_check
        _
      $region10: #{relation_conv_block.3} parent=5 // pred_check_branch
        %138 = sbr.rel (%p135) target = $region12
      $region11: #{relation_conv_block.3} parent=5 // pred_region
        %s139 = ssub.s32 %s10, 1
        // Predicated region
        $region13: #{relation_conv_block.3} parent=11 // pred_check
          %p140 = pneg %p57
        $region14: #{relation_conv_block.3} parent=11 // pred_check_branch
          %142 = sbr.rel (%p140) target = $region16
        $region15: #{relation_conv_block.3} parent=11 // pred_region
          _
        $region16: #{relation_conv_block.3} parent=11 // pred_fallthru
          _
        // Predicated region
        $region17: #{relation_conv_block.3} parent=11 // pred_check
          %p143 = pneg %p78
        $region18: #{relation_conv_block.3} parent=11 // pred_check_branch
          %145 = sbr.rel (%p143) target = $region20
        $region19: #{relation_conv_block.3} parent=11 // pred_region
          _
        $region20: #{relation_conv_block.3} parent=11 // pred_fallthru
          _
        // Predicated region
        $region21: #{relation_conv_block.3} parent=11 // pred_check
          %p146 = pneg %p99
        $region22: #{relation_conv_block.3} parent=11 // pred_check_branch
          %148 = sbr.rel (%p146) target = $region24
        $region23: #{relation_conv_block.3} parent=11 // pred_region
          _
        $region24: #{relation_conv_block.3} parent=11 // pred_fallthru
          _
      $region12: #{relation_conv_block.3} parent=5 // pred_fallthru
        _
      %p149 = scmp.lt.s32.totalorder %s10, 2
      // Predicated region
      $region25: #{relation_conv_block.3} parent=5 // pred_check
        %p150 = pneg %p149
      $region26: #{relation_conv_block.3} parent=5 // pred_check_branch
        %152 = sbr.rel (%p150) target = $region28
      $region27: #{relation_conv_block.3} parent=5 // pred_region
        // Predicated region
        $region29: #{relation_conv_block.3} parent=27 // pred_check
          %p153 = pneg %p30
        $region30: #{relation_conv_block.3} parent=27 // pred_check_branch
          %155 = sbr.rel (%p153) target = $region32
        $region31: #{relation_conv_block.3} parent=27 // pred_region
          %s156 = sand.u32 %s20, 1
          %s157 = sand.u32 %s20, 1
          %s158 = smul.addr %s157, 112
          %s159 = scalar_lea.vmem [#allocation2], %s158
          %s160 = smul.u32 7, %s10
          %s161 = smul.addr %s160, 4
          %s162 = scalar_lea.vmem %s0, %s161
          // Predicated region
          $region33: #{relation_conv_block.3} parent=31 // pred_check
            _
          $region34: #{relation_conv_block.3} parent=31 // pred_check_branch
            %164 = sbr.rel (0) target = $region36
          $region35: #{relation_conv_block.3} parent=31 // pred_region
            // Predicated region
            $region37: #{relation_conv_block.3} parent=35 // pred_check
              _
            $region38: #{relation_conv_block.3} parent=35 // pred_check_branch
              %166 = sbr.rel target = $region40
            $region39: #{relation_conv_block.3} parent=35 // pred_region
              // Predicated region
              $region52: #{relation_conv_block.3} parent=39 // pred_check
                _
              $region53: #{relation_conv_block.3} parent=39 // pred_check_branch
                %236 = sbr.rel (0) target = $region55
              $region54: #{relation_conv_block.3} parent=39 // pred_region
                loop: start=0, step=1, limit=1
                $region56: #{relation_conv_block.3} parent=54 // loop_pre_header
                  _
                $region57: #{relation_conv_block.3} parent=54 // loop_header
                  %s238 = sphi 0, %s242
                  %p239 = scmp.ge.s32.totalorder %s238, 1
                  %s243 = sphi %s162, %s162
                  %s244 = sphi %s159, %s159
                $region58: #{relation_conv_block.3} parent=54 // loop_header_branch
                  %241 = sbr.rel (%p239) target = $region62
                $region59: #{relation_conv_block.3} parent=54 // loop_body
                  _
                $region60: #{relation_conv_block.3} parent=54 // loop_footer
                  %s242 = sadd.s32 1, %s238
                $region61: #{relation_conv_block.3} parent=54 // loop_footer_branch
                  %237 = sbr.rel target = $region57
                $region62: #{relation_conv_block.3} parent=54 // loop_exit
                  _
                %s246 = ssub.s32 16, 1
                loop: start=0, step=1, limit=1
                $region63: #{relation_conv_block.3} parent=54 // loop_pre_header
                  _
                $region64: #{relation_conv_block.3} parent=54 // loop_header
                  %s248 = sphi 0, %s252
                  %p249 = scmp.ge.s32.totalorder %s248, 1
                  %s253 = sphi %s162, %s162
                  %s254 = sphi %s159, %s159
                $region65: #{relation_conv_block.3} parent=54 // loop_header_branch
                  %251 = sbr.rel (%p249) target = $region69
                $region66: #{relation_conv_block.3} parent=54 // loop_body
                  %v255 = vld [vmem:[%s253] sm:%s246]
                  %256 = vst [vmem:[%s254] sm:%s246] %v255
                  %v257 = vld [vmem:[%s253 + $0x4] sm:%s246]
                  %258 = vst [vmem:[%s254 + $0x4] sm:%s246] %v257
                  %v259 = vld [vmem:[%s253 + $0x8] sm:%s246]
                  %260 = vst [vmem:[%s254 + $0x8] sm:%s246] %v259
                  %v261 = vld [vmem:[%s253 + $0xc] sm:%s246]
                  %262 = vst [vmem:[%s254 + $0xc] sm:%s246] %v261
                  %v263 = vld [vmem:[%s253 + $0x10] sm:%s246]
                  %264 = vst [vmem:[%s254 + $0x10] sm:%s246] %v263
                  %v265 = vld [vmem:[%s253 + $0x14] sm:%s246]
                  %266 = vst [vmem:[%s254 + $0x14] sm:%s246] %v265
                  %v267 = vld [vmem:[%s253 + $0x18] sm:%s246]
                  %268 = vst [vmem:[%s254 + $0x18] sm:%s246] %v267
                  %v269 = vld [vmem:[%s253 + $0x38] sm:%s246]
                  %270 = vst [vmem:[%s254 + $0x1c] sm:%s246] %v269
                  %v271 = vld [vmem:[%s253 + $0x3c] sm:%s246]
                  %272 = vst [vmem:[%s254 + $0x20] sm:%s246] %v271
                  %v273 = vld [vmem:[%s253 + $0x40] sm:%s246]
                  %274 = vst [vmem:[%s254 + $0x24] sm:%s246] %v273
                  %v275 = vld [vmem:[%s253 + $0x44] sm:%s246]
                  %276 = vst [vmem:[%s254 + $0x28] sm:%s246] %v275
                  %v277 = vld [vmem:[%s253 + $0x48] sm:%s246]
                  %278 = vst [vmem:[%s254 + $0x2c] sm:%s246] %v277
                  %v279 = vld [vmem:[%s253 + $0x4c] sm:%s246]
                  %280 = vst [vmem:[%s254 + $0x30] sm:%s246] %v279
                  %v281 = vld [vmem:[%s253 + $0x50] sm:%s246]
                  %282 = vst [vmem:[%s254 + $0x34] sm:%s246] %v281
                  %v283 = vld [vmem:[%s253 + $0x70] sm:%s246]
                  %284 = vst [vmem:[%s254 + $0x38] sm:%s246] %v283
                  %v285 = vld [vmem:[%s253 + $0x74] sm:%s246]
                  %286 = vst [vmem:[%s254 + $0x3c] sm:%s246] %v285
                  %v287 = vld [vmem:[%s253 + $0x78] sm:%s246]
                  %288 = vst [vmem:[%s254 + $0x40] sm:%s246] %v287
                  %v289 = vld [vmem:[%s253 + $0x7c] sm:%s246]
                  %290 = vst [vmem:[%s254 + $0x44] sm:%s246] %v289
                  %v291 = vld [vmem:[%s253 + $0x80] sm:%s246]
                  %292 = vst [vmem:[%s254 + $0x48] sm:%s246] %v291
                  %v293 = vld [vmem:[%s253 + $0x84] sm:%s246]
                  %294 = vst [vmem:[%s254 + $0x4c] sm:%s246] %v293
                  %v295 = vld [vmem:[%s253 + $0x88] sm:%s246]
                  %296 = vst [vmem:[%s254 + $0x50] sm:%s246] %v295
                  %v297 = vld [vmem:[%s253 + $0xa8] sm:%s246]
                  %298 = vst [vmem:[%s254 + $0x54] sm:%s246] %v297
                  %v299 = vld [vmem:[%s253 + $0xac] sm:%s246]
                  %300 = vst [vmem:[%s254 + $0x58] sm:%s246] %v299
                  %v301 = vld [vmem:[%s253 + $0xb0] sm:%s246]
                  %302 = vst [vmem:[%s254 + $0x5c] sm:%s246] %v301
                  %v303 = vld [vmem:[%s253 + $0xb4] sm:%s246]
                  %304 = vst [vmem:[%s254 + $0x60] sm:%s246] %v303
                  %v305 = vld [vmem:[%s253 + $0xb8] sm:%s246]
                  %306 = vst [vmem:[%s254 + $0x64] sm:%s246] %v305
                  %v307 = vld [vmem:[%s253 + $0xbc] sm:%s246]
                  %308 = vst [vmem:[%s254 + $0x68] sm:%s246] %v307
                  %v309 = vld [vmem:[%s253 + $0xc0] sm:%s246]
                  %310 = vst [vmem:[%s254 + $0x6c] sm:%s246] %v309
                $region67: #{relation_conv_block.3} parent=54 // loop_footer
                  %s252 = sadd.s32 1, %s248
                $region68: #{relation_conv_block.3} parent=54 // loop_footer_branch
                  %247 = sbr.rel target = $region64
                $region69: #{relation_conv_block.3} parent=54 // loop_exit
                  _
              $region55: #{relation_conv_block.3} parent=39 // pred_fallthru
                _
            $region40: #{relation_conv_block.3} parent=35 // pred_fallthru
              _
            // Predicated region
            $region41: #{relation_conv_block.3} parent=35 // pred_check
              _
            $region42: #{relation_conv_block.3} parent=35 // pred_check_branch
              %168 = sbr.rel (0) target = $region44
            $region43: #{relation_conv_block.3} parent=35 // pred_region
              %s170 = ssub.s32 16, 1
              loop: start=0, step=1, limit=1
              $region45: #{relation_conv_block.3} parent=43 // loop_pre_header
                _
              $region46: #{relation_conv_block.3} parent=43 // loop_header
                %s172 = sphi 0, %s176
                %p173 = scmp.ge.s32.totalorder %s172, 1
                %s177 = sphi %s162, %s162
                %s178 = sphi %s159, %s159
              $region47: #{relation_conv_block.3} parent=43 // loop_header_branch
                %175 = sbr.rel (%p173) target = $region51
              $region48: #{relation_conv_block.3} parent=43 // loop_body
                %v179 = vld [vmem:[%s177] sm:%s170]
                %180 = vst [vmem:[%s178] sm:%s170] %v179
                %v181 = vld [vmem:[%s177 + $0x4] sm:%s170]
                %182 = vst [vmem:[%s178 + $0x4] sm:%s170] %v181
                %v183 = vld [vmem:[%s177 + $0x8] sm:%s170]
                %184 = vst [vmem:[%s178 + $0x8] sm:%s170] %v183
                %v185 = vld [vmem:[%s177 + $0xc] sm:%s170]
                %186 = vst [vmem:[%s178 + $0xc] sm:%s170] %v185
                %v187 = vld [vmem:[%s177 + $0x10] sm:%s170]
                %188 = vst [vmem:[%s178 + $0x10] sm:%s170] %v187
                %v189 = vld [vmem:[%s177 + $0x14] sm:%s170]
                %190 = vst [vmem:[%s178 + $0x14] sm:%s170] %v189
                %v191 = vld [vmem:[%s177 + $0x18] sm:%s170]
                %192 = vst [vmem:[%s178 + $0x18] sm:%s170] %v191
                %v193 = vld [vmem:[%s177 + $0x38] sm:%s170]
                %194 = vst [vmem:[%s178 + $0x1c] sm:%s170] %v193
                %v195 = vld [vmem:[%s177 + $0x3c] sm:%s170]
                %196 = vst [vmem:[%s178 + $0x20] sm:%s170] %v195
                %v197 = vld [vmem:[%s177 + $0x40] sm:%s170]
                %198 = vst [vmem:[%s178 + $0x24] sm:%s170] %v197
                %v199 = vld [vmem:[%s177 + $0x44] sm:%s170]
                %200 = vst [vmem:[%s178 + $0x28] sm:%s170] %v199
                %v201 = vld [vmem:[%s177 + $0x48] sm:%s170]
                %202 = vst [vmem:[%s178 + $0x2c] sm:%s170] %v201
                %v203 = vld [vmem:[%s177 + $0x4c] sm:%s170]
                %204 = vst [vmem:[%s178 + $0x30] sm:%s170] %v203
                %v205 = vld [vmem:[%s177 + $0x50] sm:%s170]
                %206 = vst [vmem:[%s178 + $0x34] sm:%s170] %v205
                %v207 = vld [vmem:[%s177 + $0x70] sm:%s170]
                %208 = vst [vmem:[%s178 + $0x38] sm:%s170] %v207
                %v209 = vld [vmem:[%s177 + $0x74] sm:%s170]
                %210 = vst [vmem:[%s178 + $0x3c] sm:%s170] %v209
                %v211 = vld [vmem:[%s177 + $0x78] sm:%s170]
                %212 = vst [vmem:[%s178 + $0x40] sm:%s170] %v211
                %v213 = vld [vmem:[%s177 + $0x7c] sm:%s170]
                %214 = vst [vmem:[%s178 + $0x44] sm:%s170] %v213
                %v215 = vld [vmem:[%s177 + $0x80] sm:%s170]
                %216 = vst [vmem:[%s178 + $0x48] sm:%s170] %v215
                %v217 = vld [vmem:[%s177 + $0x84] sm:%s170]
                %218 = vst [vmem:[%s178 + $0x4c] sm:%s170] %v217
                %v219 = vld [vmem:[%s177 + $0x88] sm:%s170]
                %220 = vst [vmem:[%s178 + $0x50] sm:%s170] %v219
                %v221 = vld [vmem:[%s177 + $0xa8] sm:%s170]
                %222 = vst [vmem:[%s178 + $0x54] sm:%s170] %v221
                %v223 = vld [vmem:[%s177 + $0xac] sm:%s170]
                %224 = vst [vmem:[%s178 + $0x58] sm:%s170] %v223
                %v225 = vld [vmem:[%s177 + $0xb0] sm:%s170]
                %226 = vst [vmem:[%s178 + $0x5c] sm:%s170] %v225
                %v227 = vld [vmem:[%s177 + $0xb4] sm:%s170]
                %228 = vst [vmem:[%s178 + $0x60] sm:%s170] %v227
                %v229 = vld [vmem:[%s177 + $0xb8] sm:%s170]
                %230 = vst [vmem:[%s178 + $0x64] sm:%s170] %v229
                %v231 = vld [vmem:[%s177 + $0xbc] sm:%s170]
                %232 = vst [vmem:[%s178 + $0x68] sm:%s170] %v231
                %v233 = vld [vmem:[%s177 + $0xc0] sm:%s170]
                %234 = vst [vmem:[%s178 + $0x6c] sm:%s170] %v233
              $region49: #{relation_conv_block.3} parent=43 // loop_footer
                %s176 = sadd.s32 1, %s172
              $region50: #{relation_conv_block.3} parent=43 // loop_footer_branch
                %171 = sbr.rel target = $region46
              $region51: #{relation_conv_block.3} parent=43 // loop_exit
                _
            $region44: #{relation_conv_block.3} parent=35 // pred_fallthru
              _
          $region36: #{relation_conv_block.3} parent=31 // pred_fallthru
            _
          %311 = vnop
        $region32: #{relation_conv_block.3} parent=27 // pred_fallthru
          _
      $region28: #{relation_conv_block.3} parent=5 // pred_fallthru
        _
      %p312 = scmp.le.s32.totalorder 1, %s10
      %p313 = scmp.lt.s32.totalorder %s10, 3
      %p314 = pnand %p312, %p313
      %p315 = pneg %p314
      // Predicated region
      $region70: #{relation_conv_block.3} parent=5 // pred_check
        _
      $region71: #{relation_conv_block.3} parent=5 // pred_check_branch
        %317 = sbr.rel (%p314) target = $region73
      $region72: #{relation_conv_block.3} parent=5 // pred_region
        %s318 = ssub.s32 %s10, 1
        %s319 = sand.u32 %s23, 1
        %s320 = sand.u32 %s23, 1
        %s321 = smul.addr %s320, 112
        %s322 = scalar_lea.vmem [#allocation2], %s321
        // Predicated region
        $region74: #{relation_conv_block.3} parent=72 // pred_check
          %p323 = pneg %p36
        $region75: #{relation_conv_block.3} parent=72 // pred_check_branch
          %325 = sbr.rel (%p323) target = $region77
        $region76: #{relation_conv_block.3} parent=72 // pred_region
          _
        $region77: #{relation_conv_block.3} parent=72 // pred_fallthru
          _
        %s326 = sand.u32 %s23, 1
        %s327 = sand.u32 %s23, 1
        %s328 = smul.addr %s327, 112
        %s329 = scalar_lea.vmem [#allocation2], %s328
        %p330 = pneg %p36
        %p331 = pneg %p33
        %p332 = pneg %p57
        %p333 = pneg %p54
        %p334 = pneg %p78
        %p335 = pneg %p75
        %p336 = pneg %p99
        %p337 = pneg %p96
        %p338 = pneg %p125
        %p339 = pneg %p122
        %s340 = smul.u32 7, %s15
        %p341 = scmp.lt.s32.totalorder %s340, 13
        %s342 = scalar_select %p341, %s340, 13
        %s343 = smul.addr %s342, 8
        %s344 = scalar_lea.vmem %s4, %s343
        %s345 = smul.u32 7, %s15
        %s346 = smul.u32 7, %s15
        %p347 = scmp.lt.s32.totalorder %s346, 13
        %s348 = scalar_select %p347, %s346, 13
        %s349 = smul.addr %s348, 8
        %s350 = scalar_lea.vmem %s4, %s349
        %s351 = smul.u32 7, %s15
        %v353 = vld [vmem:[%s1] sm:$0xf]
        %v354 = vld [vmem:[%s1 + $0x4] sm:$0xf]
        %v355 = vld [vmem:[%s1 + $0x8] sm:$0xf]
        %v356 = vld [vmem:[%s1 + $0xc] sm:$0xf]
        %v357 = vld [vmem:[%s1 + $0x10] sm:$0x3]
        %v358 = vld [vmem:[%s2] sm:$0x1]
        %v359 = vld [vmem:[%s3] sm:$0x1]
        %v360 = vld [vmem:[%s322] sm:$0xf]
        %v361 = vld [vmem:[%s322 + $0x4] sm:$0xf]
        %v362 = vld [vmem:[%s322 + $0x8] sm:$0xf]
        %v363 = vld [vmem:[%s322 + $0xc] sm:$0xf]
        %v364 = vld [vmem:[%s322 + $0x10] sm:$0xf]
        %v365 = vld [vmem:[%s322 + $0x14] sm:$0xf]
        %v366 = vld [vmem:[%s322 + $0x18] sm:$0xf]
        %v374 = vunpack.c.l.b16 %v360
        %v375 = vunpack.c.l.b16 %v361
        %v376 = vunpack.c.l.b16 %v362
        %v377 = vunpack.c.l.b16 %v363
        %v378 = vunpack.c.l.b16 %v364
        %v379 = vunpack.c.l.b16 %v365
        %v380 = vunpack.c.l.b16 %v366
        %v381 = vpack.c.b16 %v375, %v374
        %v382 = vpack.c.b16 %v377, %v376
        %v383 = vpack.c.b16 %v379, %v378
        %v384 = vpack.c.b16 %v380, %v380
        %v390 = vunpack.c.l.b16 %v353
        %v391 = vunpack.c.l.b16 %v354
        %v392 = vunpack.c.l.b16 %v355
        %v393 = vunpack.c.l.b16 %v356
        %v394 = vunpack.c.l.b16 %v357
        %v395 = vpack.c.b16 %v391, %v390
        %v396 = vpack.c.b16 %v393, %v392
        %v397 = vpack.c.b16 %v394, %v394
        %vm400 = vcmask 293888
        %v402 = vsel %vm400, %v381, 0
        %v405 = vsel %vm400, %v382, 0
        %v408 = vsel %vm400, %v383, 0
        %v411 = vsel %vm400, %v384, 0
        %vm413 = vcmask 1041408
        %v415 = vsel %vm413, %v397, 0
        %417 = vmatpush.bf16.msra.mxu0 0
        %418 = vmatpush.bf16.msra.mxu0 0
        %419 = vmatpush.bf16.msra.mxu0 0
        %420 = vmatpush.bf16.msra.mxu0 0
        %421 = vmatpush.bf16.msra.mxu0 0
        %422 = vmatpush.bf16.msra.mxu0 %v415
        %423 = vmatpush.bf16.msra.mxu0 %v396
        %424 = vmatpush.bf16.msra.mxu0 %v395
        %425 = vmatmul.bf16.gmra.mxu0 %v402
        %v426 = vpop.f32.mrf.mxu0
        %v427 = vadd.f32 0.0, %v426
        %v428 = vpop.f32.mrf.mxu0
        %v429 = vadd.f32 0.0, %v428
        %430 = vmatmul.bf16.gmra.mxu0 %v405
        %v431 = vpop.f32.mrf.mxu0
        %v432 = vadd.f32 0.0, %v431
        %v433 = vpop.f32.mrf.mxu0
        %v434 = vadd.f32 0.0, %v433
        %435 = vmatmul.bf16.gmra.mxu0 %v408
        %v436 = vpop.f32.mrf.mxu0
        %v437 = vadd.f32 0.0, %v436
        %v438 = vpop.f32.mrf.mxu0
        %v439 = vadd.f32 0.0, %v438
        %440 = vmatmul.bf16.gmra.mxu0 %v411
        %v441 = vpop.f32.mrf.mxu0
        %v442 = vadd.f32 0.0, %v441
        %v443 = vpop.f32.mrf.mxu0
        %444 = vdwg.mxu0
        %v446 = vperm.slane %v358, 0
        %v448 = vmul.f32 %v427, %v446
        %v449 = vmul.f32 %v429, %v446
        %v450 = vmul.f32 %v432, %v446
        %v451 = vmul.f32 %v434, %v446
        %v452 = vmul.f32 %v437, %v446
        %v453 = vmul.f32 %v439, %v446
        %v454 = vmul.f32 %v442, %v446
        %v456 = vperm.slane %v359, 0
        %v458 = vadd.f32 %v448, %v456
        %v459 = vadd.f32 %v449, %v456
        %v460 = vadd.f32 %v450, %v456
        %v461 = vadd.f32 %v451, %v456
        %v462 = vadd.f32 %v452, %v456
        %v463 = vadd.f32 %v453, %v456
        %v464 = vadd.f32 %v454, %v456
        %v465 = vmax.f32 %v458, 0.0
        %v466 = vmax.f32 %v459, 0.0
        %v467 = vmax.f32 %v460, 0.0
        %v468 = vmax.f32 %v461, 0.0
        %v469 = vmax.f32 %v462, 0.0
        %v470 = vmax.f32 %v463, 0.0
        %v471 = vmax.f32 %v464, 0.0
        %s472 = scalar_lea.vmem %s322, 28 [#allocation2]
        %v473 = vld [vmem:[%s472] sm:$0xf]
        %v474 = vld [vmem:[%s472 + $0x4] sm:$0xf]
        %v475 = vld [vmem:[%s472 + $0x8] sm:$0xf]
        %v476 = vld [vmem:[%s472 + $0xc] sm:$0xf]
        %v477 = vld [vmem:[%s472 + $0x10] sm:$0xf]
        %v478 = vld [vmem:[%s472 + $0x14] sm:$0xf]
        %v479 = vld [vmem:[%s472 + $0x18] sm:$0xf]
        %v487 = vunpack.c.l.b16 %v473
        %v488 = vunpack.c.l.b16 %v474
        %v489 = vunpack.c.l.b16 %v475
        %v490 = vunpack.c.l.b16 %v476
        %v491 = vunpack.c.l.b16 %v477
        %v492 = vunpack.c.l.b16 %v478
        %v493 = vunpack.c.l.b16 %v479
        %v494 = vpack.c.b16 %v488, %v487
        %v495 = vpack.c.b16 %v490, %v489
        %v496 = vpack.c.b16 %v492, %v491
        %v497 = vpack.c.b16 %v493, %v493
        %v499 = vsel %vm400, %v494, 0
        %v502 = vsel %vm400, %v495, 0
        %v505 = vsel %vm400, %v496, 0
        %v508 = vsel %vm400, %v497, 0
        %510 = vmatpush.bf16.msra.mxu0 0
        %511 = vmatpush.bf16.msra.mxu0 0
        %512 = vmatpush.bf16.msra.mxu0 0
        %513 = vmatpush.bf16.msra.mxu0 0
        %514 = vmatpush.bf16.msra.mxu0 0
        %515 = vmatpush.bf16.msra.mxu0 %v415
        %516 = vmatpush.bf16.msra.mxu0 %v396
        %517 = vmatpush.bf16.msra.mxu0 %v395
        %518 = vmatmul.bf16.gmra.mxu0 %v499
        %v519 = vpop.f32.mrf.mxu0
        %v520 = vadd.f32 0.0, %v519
        %v521 = vpop.f32.mrf.mxu0
        %v522 = vadd.f32 0.0, %v521
        %523 = vmatmul.bf16.gmra.mxu0 %v502
        %v524 = vpop.f32.mrf.mxu0
        %v525 = vadd.f32 0.0, %v524
        %v526 = vpop.f32.mrf.mxu0
        %v527 = vadd.f32 0.0, %v526
        %528 = vmatmul.bf16.gmra.mxu0 %v505
        %v529 = vpop.f32.mrf.mxu0
        %v530 = vadd.f32 0.0, %v529
        %v531 = vpop.f32.mrf.mxu0
        %v532 = vadd.f32 0.0, %v531
        %533 = vmatmul.bf16.gmra.mxu0 %v508
        %v534 = vpop.f32.mrf.mxu0
        %v535 = vadd.f32 0.0, %v534
        %v536 = vpop.f32.mrf.mxu0
        %537 = vdwg.mxu0
        %v538 = vmul.f32 %v520, %v446
        %v539 = vmul.f32 %v522, %v446
        %v540 = vmul.f32 %v525, %v446
        %v541 = vmul.f32 %v527, %v446
        %v542 = vmul.f32 %v530, %v446
        %v543 = vmul.f32 %v532, %v446
        %v544 = vmul.f32 %v535, %v446
        %v545 = vadd.f32 %v538, %v456
        %v546 = vadd.f32 %v539, %v456
        %v547 = vadd.f32 %v540, %v456
        %v548 = vadd.f32 %v541, %v456
        %v549 = vadd.f32 %v542, %v456
        %v550 = vadd.f32 %v543, %v456
        %v551 = vadd.f32 %v544, %v456
        %v552 = vmax.f32 %v545, 0.0
        %v553 = vmax.f32 %v546, 0.0
        %v554 = vmax.f32 %v547, 0.0
        %v555 = vmax.f32 %v548, 0.0
        %v556 = vmax.f32 %v549, 0.0
        %v557 = vmax.f32 %v550, 0.0
        %v558 = vmax.f32 %v551, 0.0
        %v559 = vmax.f32 %v465, %v552
        %v560 = vmax.f32 %v466, %v553
        %v561 = vmax.f32 %v467, %v554
        %v562 = vmax.f32 %v468, %v555
        %v563 = vmax.f32 %v469, %v556
        %v564 = vmax.f32 %v470, %v557
        %v565 = vmax.f32 %v471, %v558
        %s566 = scalar_lea.vmem %s322, 56 [#allocation2]
        %v567 = vld [vmem:[%s566] sm:$0xf]
        %v568 = vld [vmem:[%s566 + $0x4] sm:$0xf]
        %v569 = vld [vmem:[%s566 + $0x8] sm:$0xf]
        %v570 = vld [vmem:[%s566 + $0xc] sm:$0xf]
        %v571 = vld [vmem:[%s566 + $0x10] sm:$0xf]
        %v572 = vld [vmem:[%s566 + $0x14] sm:$0xf]
        %v573 = vld [vmem:[%s566 + $0x18] sm:$0xf]
        %v581 = vunpack.c.l.b16 %v567
        %v582 = vunpack.c.l.b16 %v568
        %v583 = vunpack.c.l.b16 %v569
        %v584 = vunpack.c.l.b16 %v570
        %v585 = vunpack.c.l.b16 %v571
        %v586 = vunpack.c.l.b16 %v572
        %v587 = vunpack.c.l.b16 %v573
        %v588 = vpack.c.b16 %v582, %v581
        %v589 = vpack.c.b16 %v584, %v583
        %v590 = vpack.c.b16 %v586, %v585
        %v591 = vpack.c.b16 %v587, %v587
        %v593 = vsel %vm400, %v588, 0
        %v596 = vsel %vm400, %v589, 0
        %v599 = vsel %vm400, %v590, 0
        %v602 = vsel %vm400, %v591, 0
        %604 = vmatpush.bf16.msra.mxu0 0
        %605 = vmatpush.bf16.msra.mxu0 0
        %606 = vmatpush.bf16.msra.mxu0 0
        %607 = vmatpush.bf16.msra.mxu0 0
        %608 = vmatpush.bf16.msra.mxu0 0
        %609 = vmatpush.bf16.msra.mxu0 %v415
        %610 = vmatpush.bf16.msra.mxu0 %v396
        %611 = vmatpush.bf16.msra.mxu0 %v395
        %612 = vmatmul.bf16.gmra.mxu0 %v593
        %v613 = vpop.f32.mrf.mxu0
        %v614 = vadd.f32 0.0, %v613
        %v615 = vpop.f32.mrf.mxu0
        %v616 = vadd.f32 0.0, %v615
        %617 = vmatmul.bf16.gmra.mxu0 %v596
        %v618 = vpop.f32.mrf.mxu0
        %v619 = vadd.f32 0.0, %v618
        %v620 = vpop.f32.mrf.mxu0
        %v621 = vadd.f32 0.0, %v620
        %622 = vmatmul.bf16.gmra.mxu0 %v599
        %v623 = vpop.f32.mrf.mxu0
        %v624 = vadd.f32 0.0, %v623
        %v625 = vpop.f32.mrf.mxu0
        %v626 = vadd.f32 0.0, %v625
        %627 = vmatmul.bf16.gmra.mxu0 %v602
        %v628 = vpop.f32.mrf.mxu0
        %v629 = vadd.f32 0.0, %v628
        %v630 = vpop.f32.mrf.mxu0
        %631 = vdwg.mxu0
        %v632 = vmul.f32 %v614, %v446
        %v633 = vmul.f32 %v616, %v446
        %v634 = vmul.f32 %v619, %v446
        %v635 = vmul.f32 %v621, %v446
        %v636 = vmul.f32 %v624, %v446
        %v637 = vmul.f32 %v626, %v446
        %v638 = vmul.f32 %v629, %v446
        %v639 = vadd.f32 %v632, %v456
        %v640 = vadd.f32 %v633, %v456
        %v641 = vadd.f32 %v634, %v456
        %v642 = vadd.f32 %v635, %v456
        %v643 = vadd.f32 %v636, %v456
        %v644 = vadd.f32 %v637, %v456
        %v645 = vadd.f32 %v638, %v456
        %v646 = vmax.f32 %v639, 0.0
        %v647 = vmax.f32 %v640, 0.0
        %v648 = vmax.f32 %v641, 0.0
        %v649 = vmax.f32 %v642, 0.0
        %v650 = vmax.f32 %v643, 0.0
        %v651 = vmax.f32 %v644, 0.0
        %v652 = vmax.f32 %v645, 0.0
        %s653 = scalar_lea.vmem %s322, 84 [#allocation2]
        %v654 = vld [vmem:[%s653] sm:$0xf]
        %v655 = vld [vmem:[%s653 + $0x4] sm:$0xf]
        %v656 = vld [vmem:[%s653 + $0x8] sm:$0xf]
        %v657 = vld [vmem:[%s653 + $0xc] sm:$0xf]
        %v658 = vld [vmem:[%s653 + $0x10] sm:$0xf]
        %v659 = vld [vmem:[%s653 + $0x14] sm:$0xf]
        %v660 = vld [vmem:[%s653 + $0x18] sm:$0xf]
        %v668 = vunpack.c.l.b16 %v654
        %v669 = vunpack.c.l.b16 %v655
        %v670 = vunpack.c.l.b16 %v656
        %v671 = vunpack.c.l.b16 %v657
        %v672 = vunpack.c.l.b16 %v658
        %v673 = vunpack.c.l.b16 %v659
        %v674 = vunpack.c.l.b16 %v660
        %v675 = vpack.c.b16 %v669, %v668
        %v676 = vpack.c.b16 %v671, %v670
        %v677 = vpack.c.b16 %v673, %v672
        %v678 = vpack.c.b16 %v674, %v674
        %v680 = vsel %vm400, %v675, 0
        %v683 = vsel %vm400, %v676, 0
        %v686 = vsel %vm400, %v677, 0
        %v689 = vsel %vm400, %v678, 0
        %691 = vmatpush.bf16.msra.mxu0 0
        %692 = vmatpush.bf16.msra.mxu0 0
        %693 = vmatpush.bf16.msra.mxu0 0
        %694 = vmatpush.bf16.msra.mxu0 0
        %695 = vmatpush.bf16.msra.mxu0 0
        %696 = vmatpush.bf16.msra.mxu0 %v415
        %697 = vmatpush.bf16.msra.mxu0 %v396
        %698 = vmatpush.bf16.msra.mxu0 %v395
        %699 = vmatmul.bf16.gmra.mxu0 %v680
        %v700 = vpop.f32.mrf.mxu0
        %v701 = vadd.f32 0.0, %v700
        %v702 = vpop.f32.mrf.mxu0
        %v703 = vadd.f32 0.0, %v702
        %704 = vmatmul.bf16.gmra.mxu0 %v683
        %v705 = vpop.f32.mrf.mxu0
        %v706 = vadd.f32 0.0, %v705
        %v707 = vpop.f32.mrf.mxu0
        %v708 = vadd.f32 0.0, %v707
        %709 = vmatmul.bf16.gmra.mxu0 %v686
        %v710 = vpop.f32.mrf.mxu0
        %v711 = vadd.f32 0.0, %v710
        %v712 = vpop.f32.mrf.mxu0
        %v713 = vadd.f32 0.0, %v712
        %714 = vmatmul.bf16.gmra.mxu0 %v689
        %v715 = vpop.f32.mrf.mxu0
        %v716 = vadd.f32 0.0, %v715
        %v717 = vpop.f32.mrf.mxu0
        %718 = vdwg.mxu0
        %v719 = vmul.f32 %v701, %v446
        %v720 = vmul.f32 %v703, %v446
        %v721 = vmul.f32 %v706, %v446
        %v722 = vmul.f32 %v708, %v446
        %v723 = vmul.f32 %v711, %v446
        %v724 = vmul.f32 %v713, %v446
        %v725 = vmul.f32 %v716, %v446
        %v726 = vadd.f32 %v719, %v456
        %v727 = vadd.f32 %v720, %v456
        %v728 = vadd.f32 %v721, %v456
        %v729 = vadd.f32 %v722, %v456
        %v730 = vadd.f32 %v723, %v456
        %v731 = vadd.f32 %v724, %v456
        %v732 = vadd.f32 %v725, %v456
        %v733 = vmax.f32 %v726, 0.0
        %v734 = vmax.f32 %v727, 0.0
        %v735 = vmax.f32 %v728, 0.0
        %v736 = vmax.f32 %v729, 0.0
        %v737 = vmax.f32 %v730, 0.0
        %v738 = vmax.f32 %v731, 0.0
        %v739 = vmax.f32 %v732, 0.0
        %v740 = vmax.f32 %v646, %v733
        %v741 = vmax.f32 %v647, %v734
        %v742 = vmax.f32 %v648, %v735
        %v743 = vmax.f32 %v649, %v736
        %v744 = vmax.f32 %v650, %v737
        %v745 = vmax.f32 %v651, %v738
        %v746 = vmax.f32 %v652, %v739
        %v747 = vmax.f32 %v559, %v740
        %v748 = vmax.f32 %v560, %v741
        %v749 = vmax.f32 %v561, %v742
        %v750 = vmax.f32 %v562, %v743
        %v751 = vmax.f32 %v563, %v744
        %v752 = vmax.f32 %v564, %v745
        %v753 = vmax.f32 %v565, %v746
        %754 = vst [vmem:[%s350] sm:$0xff] %v747
        %755 = vst [vmem:[%s350 + $0x8] sm:$0xff] %v748
        %756 = vst [vmem:[%s350 + $0x10] sm:$0xff] %v749
        %757 = vst [vmem:[%s350 + $0x18] sm:$0xff] %v750
        %758 = vst [vmem:[%s350 + $0x20] sm:$0xff] %v751
        %759 = vst [vmem:[%s350 + $0x28] sm:$0xff] %v752
        %760 = vst [vmem:[%s350 + $0x30] sm:$0xff] %v753
        %s761 = smul.u32 7, %s15
        %p762 = scmp.lt.s32.totalorder %s761, 13
        %s763 = scalar_select %p762, %s761, 13
        %s764 = smul.addr %s763, 8
        %s765 = scalar_lea.vmem %s4, %s764
        // Predicated region
        $region78: #{relation_conv_block.3} parent=72 // pred_check
          %p766 = pneg %p122
        $region79: #{relation_conv_block.3} parent=72 // pred_check_branch
          %768 = sbr.rel (%p766) target = $region81
        $region80: #{relation_conv_block.3} parent=72 // pred_region
          %s769 = smul.u32 7, %s15
        $region81: #{relation_conv_block.3} parent=72 // pred_fallthru
          _
      $region73: #{relation_conv_block.3} parent=5 // pred_fallthru
        _
      %p770 = scmp.le.s32.totalorder 2, %s10
      // Predicated region
      $region82: #{relation_conv_block.3} parent=5 // pred_check
        %p771 = pneg %p770
      $region83: #{relation_conv_block.3} parent=5 // pred_check_branch
        %773 = sbr.rel (%p771) target = $region85
      $region84: #{relation_conv_block.3} parent=5 // pred_region
        %s774 = ssub.s32 %s10, 2
        // Predicated region
        $region86: #{relation_conv_block.3} parent=84 // pred_check
          %p775 = pneg %p128
        $region87: #{relation_conv_block.3} parent=84 // pred_check_branch
          %777 = sbr.rel (%p775) target = $region89
        $region88: #{relation_conv_block.3} parent=84 // pred_region
          %s778 = smul.u32 7, %s16
          %p779 = scmp.lt.s32.totalorder %s778, 13
          %s780 = scalar_select %p779, %s778, 13
          %s781 = smul.addr %s780, 8
          %s782 = scalar_lea.vmem %s4, %s781
        $region89: #{relation_conv_block.3} parent=84 // pred_fallthru
          _
      $region85: #{relation_conv_block.3} parent=5 // pred_fallthru
        _
    $region6: #{relation_conv_block.3} parent=1 // loop_footer
      %s14 = sadd.s32 1, %s10
    $region7: #{relation_conv_block.3} parent=1 // loop_footer_branch
      %9 = sbr.rel target = $region3
    $region8: #{relation_conv_block.3} parent=1 // loop_exit
      _

</llo_original>
